<compile_context>
chip_gen: v5e
topology: v5e:2x2
jax: 0.10.0
libtpu: 0.0.40
codegen_flags: <defaults>
</compile_context>

<pallas_src>
import functools

import jax
import jax.numpy as jnp
from jax.experimental import pallas as pl
from jax.experimental.pallas import tpu as pltpu


def _vmem_spec():
    # whole array, resident in VMEM (shapes here are small)
    return pl.BlockSpec(memory_space=pltpu.MemorySpace.VMEM)


# --------------------------------------------------------------------------
# One GATConv layer (dense-masked attention, eval mode), fully in-kernel.
#   x_in:      [N, Fin]        (traced value)
#   w_ref:     [Fin, H*C]      projection (lin1 pre-folded for layer 1)
#   pre_b_ref: [1, H*C] or None  (folded lin1 bias, layer 1 only)
#   asbd/adbd: [H*C, H]        block-diagonal att_src / att_dst projections
#   bias_ref:  [1, H*C]        post-aggregation bias
#   mask_b:    [N, N] bool     mask_b[i, j] = edge j->i exists (incl. self)
#   out_s:     VMEM scratch [N, H*C] -- per-head results written in place
# --------------------------------------------------------------------------
def _gat_layer(x_in, w_ref, pre_b_ref, asbd_ref, adbd_ref, bias_ref,
               mask_b, out_s, *, heads, out_ch, slope):
    xw = jnp.dot(x_in, w_ref[...], preferred_element_type=jnp.float32)   # [N,H*C]
    if pre_b_ref is not None:
        xw = xw + pre_b_ref[...]

    # Batched attention coefficients for all heads at once:
    #   a_d[n, h] = <xw[n, hC:(h+1)C], att_dst[h]>,   a_s likewise.
    a_d = jnp.dot(xw, adbd_ref[...], preferred_element_type=jnp.float32)  # [N,H]
    a_s = jnp.dot(xw, asbd_ref[...], preferred_element_type=jnp.float32)  # [N,H]
    a_s_t = jnp.transpose(a_s)                                            # [H,N]

    bias = bias_ref[...]                                                  # [1,H*C]
    neg = jnp.float32(-1e30)

    for h in range(heads):
        lo, hi = h * out_ch, (h + 1) * out_ch
        e = a_d[:, h:h + 1] + a_s_t[h:h + 1, :]                           # [N,N]
        e = jnp.where(e > 0, e, slope * e)                                # LeakyReLU
        e = jnp.where(mask_b, e, neg)                                     # mask non-edges
        e = e - jnp.max(e, axis=1, keepdims=True)
        p = jnp.where(mask_b, jnp.exp(e), 0.0)
        inv = pl.reciprocal(jnp.sum(p, axis=1, keepdims=True), approx=True)
        att = p * inv
        out_s[:, lo:hi] = (
            jnp.dot(att, xw[:, lo:hi], preferred_element_type=jnp.float32)
            + bias[:, lo:hi])
    return out_s[...]


# --------------------------------------------------------------------------
# Fused NIRM forward kernel
# --------------------------------------------------------------------------
def nirm_kernel(x_ref, a_ref,
                w1_ref, pb1_ref, as1_ref, ad1_ref, b1_ref,
                w2_ref, as2_ref, ad2_ref, b2_ref,
                w3_ref, as3_ref, ad3_ref, b3_ref,
                lin2_ref,
                out_ref,
                x2_s, x3_s, x4_s,
                *, slope):
    x = x_ref[...]                       # [N, 5]
    a = a_ref[...]                       # [N, N]  A[src, dst] incl. self loops
    # Attention mask (incoming edges per target incl. self loops) == A^T.
    # Single transpose, hoisted and reused by all 3 layers / all heads.
    mask_b = jnp.transpose(a) > 0

    # conv1 (lin1 folded into the projection), conv2, conv3
    x2 = _gat_layer(x, w1_ref, pb1_ref, as1_ref, ad1_ref, b1_ref,
                    mask_b, x2_s, heads=8, out_ch=4, slope=slope)          # [N,32]
    x3 = _gat_layer(x2, w2_ref, None, as2_ref, ad2_ref, b2_ref,
                    mask_b, x3_s, heads=4, out_ch=4, slope=slope)          # [N,16]
    x5 = _gat_layer(x3, w3_ref, None, as3_ref, ad3_ref, b3_ref,
                    mask_b, x4_s, heads=2, out_ch=4, slope=slope)          # [N, 8]
    # F.dropout(p=0.3, training=False) -> identity

    # Ranking head:
    #   Adj  = row-L1-normalize(A)
    #   r3   = Adj @ x5
    #   local[i] = sum_j Adj[i,j] <x5_i, x5_j> + deg[i] = <x5_i, r3_i> + deg[i]
    #   global   = r3 @ w2
    inv_row = pl.reciprocal(jnp.sum(a, axis=1, keepdims=True), approx=True)
    adj = a * inv_row
    r3 = jnp.dot(adj, x5, preferred_element_type=jnp.float32)              # [N, 8]
    local = jnp.sum(x5 * r3, axis=1, keepdims=True) + x[:, 0:1]            # [N, 1]
    glob = jnp.dot(r3, lin2_ref[...], preferred_element_type=jnp.float32)  # [N, 1]
    out_ref[...] = local + glob


# --------------------------------------------------------------------------
# Parameters (deterministic init; shapes from NIRM.__init__)
# --------------------------------------------------------------------------
def init_params(key):
    ks = jax.random.split(key, 15)

    def g(k, shape, scale=0.2):
        return (scale * jax.random.normal(k, shape)).astype(jnp.float32)

    return {
        # Linear(5, 1, bias=True)
        "lin1_w": g(ks[0], (5, 1)),
        "lin1_b": g(ks[1], (1, 1)),
        # GATConv(1, 4, heads=8)
        "g1_w": g(ks[2], (1, 32)),
        "g1_as": g(ks[3], (8, 4)),
        "g1_ad": g(ks[4], (8, 4)),
        "g1_b": g(ks[5], (1, 32)),
        # GATConv(32, 4, heads=4)
        "g2_w": g(ks[6], (32, 16)),
        "g2_as": g(ks[7], (4, 4)),
        "g2_ad": g(ks[8], (4, 4)),
        "g2_b": g(ks[9], (1, 16)),
        # GATConv(16, 4, heads=2)
        "g3_w": g(ks[10], (16, 8)),
        "g3_as": g(ks[11], (2, 4)),
        "g3_ad": g(ks[12], (2, 4)),
        "g3_b": g(ks[13], (1, 8)),
        # Linear(8, 1, bias=False)  (applied as r3 @ w)
        "lin2_w": g(ks[14], (8, 1)),
    }


def _block_diag(att, heads, out_ch):
    """[H, C] attention vector -> [H*C, H] block-diagonal projection matrix."""
    eye = jnp.eye(heads, dtype=jnp.float32)
    return (att[:, :, None] * eye[:, None, :]).reshape(heads * out_ch, heads)


# --------------------------------------------------------------------------
# Full forward: dense adjacency build + tiny parameter pre-folds in plain JAX,
# everything else in the single fused Pallas kernel.
# --------------------------------------------------------------------------
@functools.partial(jax.jit, static_argnames=("num_nodes",))
def nirm_forward(x, edge_index, num_nodes, params):
    n = num_nodes
    src, dst = edge_index[0], edge_index[1]
    diag = jnp.arange(n)

    # Single [N,N] adjacency: A[src, dst] with fill_diag(1).
    # (The attention mask == A^T is derived inside the kernel.)
    a = (jnp.zeros((n, n), jnp.float32)
         .at[src, dst].set(1.0)
         .at[diag, diag].set(1.0))

    # Fold Linear(5,1) into the first GAT projection (exact identity).
    w1f = params["lin1_w"] @ params["g1_w"]          # [5, 32]
    pb1 = params["lin1_b"] @ params["g1_w"]          # [1, 32]

    # Block-diagonal attention projections (a_src / a_dst for all heads in
    # one matmul each inside the kernel).
    as1 = _block_diag(params["g1_as"], 8, 4)         # [32, 8]
    ad1 = _block_diag(params["g1_ad"], 8, 4)
    as2 = _block_diag(params["g2_as"], 4, 4)         # [16, 4]
    ad2 = _block_diag(params["g2_ad"], 4, 4)
    as3 = _block_diag(params["g3_as"], 2, 4)         # [8, 2]
    ad3 = _block_diag(params["g3_ad"], 2, 4)

    kernel = functools.partial(nirm_kernel, slope=0.2)
    return pl.pallas_call(
        kernel,
        out_shape=jax.ShapeDtypeStruct((n, 1), jnp.float32),
        in_specs=[_vmem_spec()] * 16,
        out_specs=_vmem_spec(),
        scratch_shapes=[
            pltpu.VMEM((n, 32), jnp.float32),   # x2
            pltpu.VMEM((n, 16), jnp.float32),   # x3
            pltpu.VMEM((n, 8), jnp.float32),    # x4 / x5
        ],
        compiler_params=pltpu.CompilerParams(
            vmem_limit_bytes=48 * 1024 * 1024),
    )(x, a,
      w1f, pb1, as1, ad1, params["g1_b"],
      params["g2_w"], as2, ad2, params["g2_b"],
      params["g3_w"], as3, ad3, params["g3_b"],
      params["lin2_w"])


if __name__ == "__main__":
    key = jax.random.PRNGKey(0)
    k_x, k_src, k_dst, k_par = jax.random.split(key, 4)

    num_nodes, num_edges = 16, 40
    x = jax.random.normal(k_x, (num_nodes, 5), dtype=jnp.float32)
    src = jax.random.randint(k_src, (num_edges,), 0, num_nodes)
    dst = jax.random.randint(k_dst, (num_edges,), 0, num_nodes)
    edge_index = jnp.stack([src, dst]).astype(jnp.int32)

    params = init_params(k_par)

    out = nirm_forward(x, edge_index, num_nodes, params)
    out = jax.block_until_ready(out)

    assert out.shape == (num_nodes, 1)
    assert bool(jnp.all(jnp.isfinite(out)))
    print("KERNEL_OK")
</pallas_src>

<mosaic_0001>
module attributes {stable_mosaic.version = 11 : i64} {
  func.func @nirm_kernel(%arg0: memref<16x5xf32, #tpu.memory_space<vmem>>, %arg1: memref<16x16xf32, #tpu.memory_space<vmem>>, %arg2: memref<5x32xf32, #tpu.memory_space<vmem>>, %arg3: memref<1x32xf32, #tpu.memory_space<vmem>>, %arg4: memref<32x8xf32, #tpu.memory_space<vmem>>, %arg5: memref<32x8xf32, #tpu.memory_space<vmem>>, %arg6: memref<1x32xf32, #tpu.memory_space<vmem>>, %arg7: memref<32x16xf32, #tpu.memory_space<vmem>>, %arg8: memref<16x4xf32, #tpu.memory_space<vmem>>, %arg9: memref<16x4xf32, #tpu.memory_space<vmem>>, %arg10: memref<1x16xf32, #tpu.memory_space<vmem>>, %arg11: memref<16x8xf32, #tpu.memory_space<vmem>>, %arg12: memref<8x2xf32, #tpu.memory_space<vmem>>, %arg13: memref<8x2xf32, #tpu.memory_space<vmem>>, %arg14: memref<1x8xf32, #tpu.memory_space<vmem>>, %arg15: memref<8x1xf32, #tpu.memory_space<vmem>>, %arg16: memref<16x1xf32, #tpu.memory_space<vmem>>, %arg17: memref<16x32xf32, #tpu.memory_space<vmem>>, %arg18: memref<16x16xf32, #tpu.memory_space<vmem>>, %arg19: memref<16x8xf32, #tpu.memory_space<vmem>>) attributes {dimension_semantics = [], scalar_prefetch = 0 : i64, scratch_operands = 3 : i64, tpu.core_type = #tpu.core_type<tc>} {
    %c0 = arith.constant 0 : index
    %c0_0 = arith.constant 0 : index
    %0 = vector.load %arg0[%c0, %c0_0] : memref<16x5xf32, #tpu.memory_space<vmem>>, vector<16x5xf32>
    %c0_1 = arith.constant 0 : index
    %c0_2 = arith.constant 0 : index
    %1 = vector.load %arg1[%c0_1, %c0_2] : memref<16x16xf32, #tpu.memory_space<vmem>>, vector<16x16xf32>
    %2 = tpu.transpose %1, [1, 0] : vector<16x16xf32> -> vector<16x16xf32>
    %cst = arith.constant 0.000000e+00 : f32
    %3 = vector.broadcast %cst : f32 to vector<16x16xf32>
    %4 = arith.cmpf ogt, %2, %3 : vector<16x16xf32>
    %c0_3 = arith.constant 0 : index
    %c0_4 = arith.constant 0 : index
    %5 = vector.load %arg2[%c0_3, %c0_4] : memref<5x32xf32, #tpu.memory_space<vmem>>, vector<5x32xf32>
    %cst_5 = arith.constant dense<0.000000e+00> : vector<16x32xf32>
    %6 = tpu.matmul %0, %5, %cst_5 {dimension_numbers = #tpu.dot_dimension_numbers<[1], [0], [0], [1], [0, 0, 1, 1], [], []>} : vector<16x5xf32>, vector<5x32xf32>, vector<16x32xf32> -> vector<16x32xf32>
    %c0_6 = arith.constant 0 : index
    %c0_7 = arith.constant 0 : index
    %7 = vector.load %arg3[%c0_6, %c0_7] : memref<1x32xf32, #tpu.memory_space<vmem>>, vector<1x32xf32>
    %8 = vector.broadcast %7 : vector<1x32xf32> to vector<16x32xf32>
    %9 = arith.addf %6, %8 : vector<16x32xf32>
    %c0_8 = arith.constant 0 : index
    %c0_9 = arith.constant 0 : index
    %10 = vector.load %arg5[%c0_8, %c0_9] : memref<32x8xf32, #tpu.memory_space<vmem>>, vector<32x8xf32>
    %cst_10 = arith.constant dense<0.000000e+00> : vector<16x8xf32>
    %11 = tpu.matmul %9, %10, %cst_10 {dimension_numbers = #tpu.dot_dimension_numbers<[1], [0], [0], [1], [0, 0, 1, 1], [], []>} : vector<16x32xf32>, vector<32x8xf32>, vector<16x8xf32> -> vector<16x8xf32>
    %c0_11 = arith.constant 0 : index
    %c0_12 = arith.constant 0 : index
    %12 = vector.load %arg4[%c0_11, %c0_12] : memref<32x8xf32, #tpu.memory_space<vmem>>, vector<32x8xf32>
    %cst_13 = arith.constant dense<0.000000e+00> : vector<16x8xf32>
    %13 = tpu.matmul %9, %12, %cst_13 {dimension_numbers = #tpu.dot_dimension_numbers<[1], [0], [0], [1], [0, 0, 1, 1], [], []>} : vector<16x32xf32>, vector<32x8xf32>, vector<16x8xf32> -> vector<16x8xf32>
    %14 = tpu.transpose %13, [1, 0] : vector<16x8xf32> -> vector<8x16xf32>
    %c0_14 = arith.constant 0 : index
    %c0_15 = arith.constant 0 : index
    %15 = vector.load %arg6[%c0_14, %c0_15] : memref<1x32xf32, #tpu.memory_space<vmem>>, vector<1x32xf32>
    %16 = vector.extract_strided_slice %11 {offsets = [0, 0], sizes = [16, 1], strides = [1, 1]} : vector<16x8xf32> to vector<16x1xf32>
    %17 = vector.extract_strided_slice %14 {offsets = [0, 0], sizes = [1, 16], strides = [1, 1]} : vector<8x16xf32> to vector<1x16xf32>
    %18 = vector.broadcast %16 : vector<16x1xf32> to vector<16x16xf32>
    %19 = vector.broadcast %17 : vector<1x16xf32> to vector<16x16xf32>
    %20 = arith.addf %18, %19 : vector<16x16xf32>
    %cst_16 = arith.constant 0.000000e+00 : f32
    %21 = vector.broadcast %cst_16 : f32 to vector<16x16xf32>
    %22 = arith.cmpf ogt, %20, %21 : vector<16x16xf32>
    %cst_17 = arith.constant 2.000000e-01 : f32
    %23 = vector.broadcast %cst_17 : f32 to vector<16x16xf32>
    %24 = arith.mulf %23, %20 : vector<16x16xf32>
    %25 = arith.select %22, %20, %24 : vector<16x16xi1>, vector<16x16xf32>
    %cst_18 = arith.constant -1.000000e+30 : f32
    %26 = vector.broadcast %cst_18 : f32 to vector<16x16xf32>
    %27 = arith.select %4, %25, %26 : vector<16x16xi1>, vector<16x16xf32>
    %cst_19 = arith.constant dense<0xFF800000> : vector<16xf32>
    %28 = vector.multi_reduction <maximumf>, %27, %cst_19 [1] : vector<16x16xf32> to vector<16xf32>
    %29 = vector.shape_cast %28 : vector<16xf32> to vector<16x1xf32>
    %30 = vector.broadcast %29 : vector<16x1xf32> to vector<16x16xf32>
    %31 = arith.subf %27, %30 : vector<16x16xf32>
    %32 = math.exp %31 : vector<16x16xf32>
    %cst_20 = arith.constant 0.000000e+00 : f32
    %33 = vector.broadcast %cst_20 : f32 to vector<16x16xf32>
    %34 = arith.select %4, %32, %33 : vector<16x16xi1>, vector<16x16xf32>
    %cst_21 = arith.constant dense<0.000000e+00> : vector<16xf32>
    %35 = vector.multi_reduction <add>, %34, %cst_21 [1] : vector<16x16xf32> to vector<16xf32>
    %36 = vector.shape_cast %35 : vector<16xf32> to vector<16x1xf32>
    %37 = tpu.reciprocal %36 {approx = true} : vector<16x1xf32> -> vector<16x1xf32>
    %38 = vector.broadcast %37 : vector<16x1xf32> to vector<16x16xf32>
    %39 = arith.mulf %34, %38 : vector<16x16xf32>
    %40 = vector.extract_strided_slice %9 {offsets = [0, 0], sizes = [16, 4], strides = [1, 1]} : vector<16x32xf32> to vector<16x4xf32>
    %cst_22 = arith.constant dense<0.000000e+00> : vector<16x4xf32>
    %41 = tpu.matmul %39, %40, %cst_22 {dimension_numbers = #tpu.dot_dimension_numbers<[1], [0], [0], [1], [0, 0, 1, 1], [], []>} : vector<16x16xf32>, vector<16x4xf32>, vector<16x4xf32> -> vector<16x4xf32>
    %42 = vector.extract_strided_slice %15 {offsets = [0, 0], sizes = [1, 4], strides = [1, 1]} : vector<1x32xf32> to vector<1x4xf32>
    %43 = vector.broadcast %42 : vector<1x4xf32> to vector<16x4xf32>
    %44 = arith.addf %41, %43 : vector<16x4xf32>
    %c0_23 = arith.constant 0 : index
    %c0_24 = arith.constant 0 : index
    %45 = vector.load %arg17[%c0_23, %c0_24] : memref<16x32xf32, #tpu.memory_space<vmem>>, vector<16x4xf32>
    tpu.vector_store %arg17[%c0_23, %c0_24], %44 {strides = array<i32>} : memref<16x32xf32, #tpu.memory_space<vmem>>, vector<16x4xf32>,
    %46 = vector.extract_strided_slice %11 {offsets = [0, 1], sizes = [16, 1], strides = [1, 1]} : vector<16x8xf32> to vector<16x1xf32>
    %47 = vector.extract_strided_slice %14 {offsets = [1, 0], sizes = [1, 16], strides = [1, 1]} : vector<8x16xf32> to vector<1x16xf32>
    %48 = vector.broadcast %46 : vector<16x1xf32> to vector<16x16xf32>
    %49 = vector.broadcast %47 : vector<1x16xf32> to vector<16x16xf32>
    %50 = arith.addf %48, %49 : vector<16x16xf32>
    %cst_25 = arith.constant 0.000000e+00 : f32
    %51 = vector.broadcast %cst_25 : f32 to vector<16x16xf32>
    %52 = arith.cmpf ogt, %50, %51 : vector<16x16xf32>
    %cst_26 = arith.constant 2.000000e-01 : f32
    %53 = vector.broadcast %cst_26 : f32 to vector<16x16xf32>
    %54 = arith.mulf %53, %50 : vector<16x16xf32>
    %55 = arith.select %52, %50, %54 : vector<16x16xi1>, vector<16x16xf32>
    %cst_27 = arith.constant -1.000000e+30 : f32
    %56 = vector.broadcast %cst_27 : f32 to vector<16x16xf32>
    %57 = arith.select %4, %55, %56 : vector<16x16xi1>, vector<16x16xf32>
    %cst_28 = arith.constant dense<0xFF800000> : vector<16xf32>
    %58 = vector.multi_reduction <maximumf>, %57, %cst_28 [1] : vector<16x16xf32> to vector<16xf32>
    %59 = vector.shape_cast %58 : vector<16xf32> to vector<16x1xf32>
    %60 = vector.broadcast %59 : vector<16x1xf32> to vector<16x16xf32>
    %61 = arith.subf %57, %60 : vector<16x16xf32>
    %62 = math.exp %61 : vector<16x16xf32>
    %cst_29 = arith.constant 0.000000e+00 : f32
    %63 = vector.broadcast %cst_29 : f32 to vector<16x16xf32>
    %64 = arith.select %4, %62, %63 : vector<16x16xi1>, vector<16x16xf32>
    %cst_30 = arith.constant dense<0.000000e+00> : vector<16xf32>
    %65 = vector.multi_reduction <add>, %64, %cst_30 [1] : vector<16x16xf32> to vector<16xf32>
    %66 = vector.shape_cast %65 : vector<16xf32> to vector<16x1xf32>
    %67 = tpu.reciprocal %66 {approx = true} : vector<16x1xf32> -> vector<16x1xf32>
    %68 = vector.broadcast %67 : vector<16x1xf32> to vector<16x16xf32>
    %69 = arith.mulf %64, %68 : vector<16x16xf32>
    %70 = vector.extract_strided_slice %9 {offsets = [0, 4], sizes = [16, 4], strides = [1, 1]} : vector<16x32xf32> to vector<16x4xf32>
    %cst_31 = arith.constant dense<0.000000e+00> : vector<16x4xf32>
    %71 = tpu.matmul %69, %70, %cst_31 {dimension_numbers = #tpu.dot_dimension_numbers<[1], [0], [0], [1], [0, 0, 1, 1], [], []>} : vector<16x16xf32>, vector<16x4xf32>, vector<16x4xf32> -> vector<16x4xf32>
    %72 = vector.extract_strided_slice %15 {offsets = [0, 4], sizes = [1, 4], strides = [1, 1]} : vector<1x32xf32> to vector<1x4xf32>
    %73 = vector.broadcast %72 : vector<1x4xf32> to vector<16x4xf32>
    %74 = arith.addf %71, %73 : vector<16x4xf32>
    %c0_32 = arith.constant 0 : index
    %c4 = arith.constant 4 : index
    %75 = vector.load %arg17[%c0_32, %c4] : memref<16x32xf32, #tpu.memory_space<vmem>>, vector<16x4xf32>
    tpu.vector_store %arg17[%c0_32, %c4], %74 {strides = array<i32>} : memref<16x32xf32, #tpu.memory_space<vmem>>, vector<16x4xf32>,
    %76 = vector.extract_strided_slice %11 {offsets = [0, 2], sizes = [16, 1], strides = [1, 1]} : vector<16x8xf32> to vector<16x1xf32>
    %77 = vector.extract_strided_slice %14 {offsets = [2, 0], sizes = [1, 16], strides = [1, 1]} : vector<8x16xf32> to vector<1x16xf32>
    %78 = vector.broadcast %76 : vector<16x1xf32> to vector<16x16xf32>
    %79 = vector.broadcast %77 : vector<1x16xf32> to vector<16x16xf32>
    %80 = arith.addf %78, %79 : vector<16x16xf32>
    %cst_33 = arith.constant 0.000000e+00 : f32
    %81 = vector.broadcast %cst_33 : f32 to vector<16x16xf32>
    %82 = arith.cmpf ogt, %80, %81 : vector<16x16xf32>
    %cst_34 = arith.constant 2.000000e-01 : f32
    %83 = vector.broadcast %cst_34 : f32 to vector<16x16xf32>
    %84 = arith.mulf %83, %80 : vector<16x16xf32>
    %85 = arith.select %82, %80, %84 : vector<16x16xi1>, vector<16x16xf32>
    %cst_35 = arith.constant -1.000000e+30 : f32
    %86 = vector.broadcast %cst_35 : f32 to vector<16x16xf32>
    %87 = arith.select %4, %85, %86 : vector<16x16xi1>, vector<16x16xf32>
    %cst_36 = arith.constant dense<0xFF800000> : vector<16xf32>
    %88 = vector.multi_reduction <maximumf>, %87, %cst_36 [1] : vector<16x16xf32> to vector<16xf32>
    %89 = vector.shape_cast %88 : vector<16xf32> to vector<16x1xf32>
    %90 = vector.broadcast %89 : vector<16x1xf32> to vector<16x16xf32>
    %91 = arith.subf %87, %90 : vector<16x16xf32>
    %92 = math.exp %91 : vector<16x16xf32>
    %cst_37 = arith.constant 0.000000e+00 : f32
    %93 = vector.broadcast %cst_37 : f32 to vector<16x16xf32>
    %94 = arith.select %4, %92, %93 : vector<16x16xi1>, vector<16x16xf32>
    %cst_38 = arith.constant dense<0.000000e+00> : vector<16xf32>
    %95 = vector.multi_reduction <add>, %94, %cst_38 [1] : vector<16x16xf32> to vector<16xf32>
    %96 = vector.shape_cast %95 : vector<16xf32> to vector<16x1xf32>
    %97 = tpu.reciprocal %96 {approx = true} : vector<16x1xf32> -> vector<16x1xf32>
    %98 = vector.broadcast %97 : vector<16x1xf32> to vector<16x16xf32>
    %99 = arith.mulf %94, %98 : vector<16x16xf32>
    %100 = vector.extract_strided_slice %9 {offsets = [0, 8], sizes = [16, 4], strides = [1, 1]} : vector<16x32xf32> to vector<16x4xf32>
    %cst_39 = arith.constant dense<0.000000e+00> : vector<16x4xf32>
    %101 = tpu.matmul %99, %100, %cst_39 {dimension_numbers = #tpu.dot_dimension_numbers<[1], [0], [0], [1], [0, 0, 1, 1], [], []>} : vector<16x16xf32>, vector<16x4xf32>, vector<16x4xf32> -> vector<16x4xf32>
    %102 = vector.extract_strided_slice %15 {offsets = [0, 8], sizes = [1, 4], strides = [1, 1]} : vector<1x32xf32> to vector<1x4xf32>
    %103 = vector.broadcast %102 : vector<1x4xf32> to vector<16x4xf32>
    %104 = arith.addf %101, %103 : vector<16x4xf32>
    %c0_40 = arith.constant 0 : index
    %c8 = arith.constant 8 : index
    %105 = vector.load %arg17[%c0_40, %c8] : memref<16x32xf32, #tpu.memory_space<vmem>>, vector<16x4xf32>
    tpu.vector_store %arg17[%c0_40, %c8], %104 {strides = array<i32>} : memref<16x32xf32, #tpu.memory_space<vmem>>, vector<16x4xf32>,
    %106 = vector.extract_strided_slice %11 {offsets = [0, 3], sizes = [16, 1], strides = [1, 1]} : vector<16x8xf32> to vector<16x1xf32>
    %107 = vector.extract_strided_slice %14 {offsets = [3, 0], sizes = [1, 16], strides = [1, 1]} : vector<8x16xf32> to vector<1x16xf32>
    %108 = vector.broadcast %106 : vector<16x1xf32> to vector<16x16xf32>
    %109 = vector.broadcast %107 : vector<1x16xf32> to vector<16x16xf32>
    %110 = arith.addf %108, %109 : vector<16x16xf32>
    %cst_41 = arith.constant 0.000000e+00 : f32
    %111 = vector.broadcast %cst_41 : f32 to vector<16x16xf32>
    %112 = arith.cmpf ogt, %110, %111 : vector<16x16xf32>
    %cst_42 = arith.constant 2.000000e-01 : f32
    %113 = vector.broadcast %cst_42 : f32 to vector<16x16xf32>
    %114 = arith.mulf %113, %110 : vector<16x16xf32>
    %115 = arith.select %112, %110, %114 : vector<16x16xi1>, vector<16x16xf32>
    %cst_43 = arith.constant -1.000000e+30 : f32
    %116 = vector.broadcast %cst_43 : f32 to vector<16x16xf32>
    %117 = arith.select %4, %115, %116 : vector<16x16xi1>, vector<16x16xf32>
    %cst_44 = arith.constant dense<0xFF800000> : vector<16xf32>
    %118 = vector.multi_reduction <maximumf>, %117, %cst_44 [1] : vector<16x16xf32> to vector<16xf32>
    %119 = vector.shape_cast %118 : vector<16xf32> to vector<16x1xf32>
    %120 = vector.broadcast %119 : vector<16x1xf32> to vector<16x16xf32>
    %121 = arith.subf %117, %120 : vector<16x16xf32>
    %122 = math.exp %121 : vector<16x16xf32>
    %cst_45 = arith.constant 0.000000e+00 : f32
    %123 = vector.broadcast %cst_45 : f32 to vector<16x16xf32>
    %124 = arith.select %4, %122, %123 : vector<16x16xi1>, vector<16x16xf32>
    %cst_46 = arith.constant dense<0.000000e+00> : vector<16xf32>
    %125 = vector.multi_reduction <add>, %124, %cst_46 [1] : vector<16x16xf32> to vector<16xf32>
    %126 = vector.shape_cast %125 : vector<16xf32> to vector<16x1xf32>
    %127 = tpu.reciprocal %126 {approx = true} : vector<16x1xf32> -> vector<16x1xf32>
    %128 = vector.broadcast %127 : vector<16x1xf32> to vector<16x16xf32>
    %129 = arith.mulf %124, %128 : vector<16x16xf32>
    %130 = vector.extract_strided_slice %9 {offsets = [0, 12], sizes = [16, 4], strides = [1, 1]} : vector<16x32xf32> to vector<16x4xf32>
    %cst_47 = arith.constant dense<0.000000e+00> : vector<16x4xf32>
    %131 = tpu.matmul %129, %130, %cst_47 {dimension_numbers = #tpu.dot_dimension_numbers<[1], [0], [0], [1], [0, 0, 1, 1], [], []>} : vector<16x16xf32>, vector<16x4xf32>, vector<16x4xf32> -> vector<16x4xf32>
    %132 = vector.extract_strided_slice %15 {offsets = [0, 12], sizes = [1, 4], strides = [1, 1]} : vector<1x32xf32> to vector<1x4xf32>
    %133 = vector.broadcast %132 : vector<1x4xf32> to vector<16x4xf32>
    %134 = arith.addf %131, %133 : vector<16x4xf32>
    %c0_48 = arith.constant 0 : index
    %c12 = arith.constant 12 : index
    %135 = vector.load %arg17[%c0_48, %c12] : memref<16x32xf32, #tpu.memory_space<vmem>>, vector<16x4xf32>
    tpu.vector_store %arg17[%c0_48, %c12], %134 {strides = array<i32>} : memref<16x32xf32, #tpu.memory_space<vmem>>, vector<16x4xf32>,
    %136 = vector.extract_strided_slice %11 {offsets = [0, 4], sizes = [16, 1], strides = [1, 1]} : vector<16x8xf32> to vector<16x1xf32>
    %137 = vector.extract_strided_slice %14 {offsets = [4, 0], sizes = [1, 16], strides = [1, 1]} : vector<8x16xf32> to vector<1x16xf32>
    %138 = vector.broadcast %136 : vector<16x1xf32> to vector<16x16xf32>
    %139 = vector.broadcast %137 : vector<1x16xf32> to vector<16x16xf32>
    %140 = arith.addf %138, %139 : vector<16x16xf32>
    %cst_49 = arith.constant 0.000000e+00 : f32
    %141 = vector.broadcast %cst_49 : f32 to vector<16x16xf32>
    %142 = arith.cmpf ogt, %140, %141 : vector<16x16xf32>
    %cst_50 = arith.constant 2.000000e-01 : f32
    %143 = vector.broadcast %cst_50 : f32 to vector<16x16xf32>
    %144 = arith.mulf %143, %140 : vector<16x16xf32>
    %145 = arith.select %142, %140, %144 : vector<16x16xi1>, vector<16x16xf32>
    %cst_51 = arith.constant -1.000000e+30 : f32
    %146 = vector.broadcast %cst_51 : f32 to vector<16x16xf32>
    %147 = arith.select %4, %145, %146 : vector<16x16xi1>, vector<16x16xf32>
    %cst_52 = arith.constant dense<0xFF800000> : vector<16xf32>
    %148 = vector.multi_reduction <maximumf>, %147, %cst_52 [1] : vector<16x16xf32> to vector<16xf32>
    %149 = vector.shape_cast %148 : vector<16xf32> to vector<16x1xf32>
    %150 = vector.broadcast %149 : vector<16x1xf32> to vector<16x16xf32>
    %151 = arith.subf %147, %150 : vector<16x16xf32>
    %152 = math.exp %151 : vector<16x16xf32>
    %cst_53 = arith.constant 0.000000e+00 : f32
    %153 = vector.broadcast %cst_53 : f32 to vector<16x16xf32>
    %154 = arith.select %4, %152, %153 : vector<16x16xi1>, vector<16x16xf32>
    %cst_54 = arith.constant dense<0.000000e+00> : vector<16xf32>
    %155 = vector.multi_reduction <add>, %154, %cst_54 [1] : vector<16x16xf32> to vector<16xf32>
    %156 = vector.shape_cast %155 : vector<16xf32> to vector<16x1xf32>
    %157 = tpu.reciprocal %156 {approx = true} : vector<16x1xf32> -> vector<16x1xf32>
    %158 = vector.broadcast %157 : vector<16x1xf32> to vector<16x16xf32>
    %159 = arith.mulf %154, %158 : vector<16x16xf32>
    %160 = vector.extract_strided_slice %9 {offsets = [0, 16], sizes = [16, 4], strides = [1, 1]} : vector<16x32xf32> to vector<16x4xf32>
    %cst_55 = arith.constant dense<0.000000e+00> : vector<16x4xf32>
    %161 = tpu.matmul %159, %160, %cst_55 {dimension_numbers = #tpu.dot_dimension_numbers<[1], [0], [0], [1], [0, 0, 1, 1], [], []>} : vector<16x16xf32>, vector<16x4xf32>, vector<16x4xf32> -> vector<16x4xf32>
    %162 = vector.extract_strided_slice %15 {offsets = [0, 16], sizes = [1, 4], strides = [1, 1]} : vector<1x32xf32> to vector<1x4xf32>
    %163 = vector.broadcast %162 : vector<1x4xf32> to vector<16x4xf32>
    %164 = arith.addf %161, %163 : vector<16x4xf32>
    %c0_56 = arith.constant 0 : index
    %c16 = arith.constant 16 : index
    %165 = vector.load %arg17[%c0_56, %c16] : memref<16x32xf32, #tpu.memory_space<vmem>>, vector<16x4xf32>
    tpu.vector_store %arg17[%c0_56, %c16], %164 {strides = array<i32>} : memref<16x32xf32, #tpu.memory_space<vmem>>, vector<16x4xf32>,
    %166 = vector.extract_strided_slice %11 {offsets = [0, 5], sizes = [16, 1], strides = [1, 1]} : vector<16x8xf32> to vector<16x1xf32>
    %167 = vector.extract_strided_slice %14 {offsets = [5, 0], sizes = [1, 16], strides = [1, 1]} : vector<8x16xf32> to vector<1x16xf32>
    %168 = vector.broadcast %166 : vector<16x1xf32> to vector<16x16xf32>
    %169 = vector.broadcast %167 : vector<1x16xf32> to vector<16x16xf32>
    %170 = arith.addf %168, %169 : vector<16x16xf32>
    %cst_57 = arith.constant 0.000000e+00 : f32
    %171 = vector.broadcast %cst_57 : f32 to vector<16x16xf32>
    %172 = arith.cmpf ogt, %170, %171 : vector<16x16xf32>
    %cst_58 = arith.constant 2.000000e-01 : f32
    %173 = vector.broadcast %cst_58 : f32 to vector<16x16xf32>
    %174 = arith.mulf %173, %170 : vector<16x16xf32>
    %175 = arith.select %172, %170, %174 : vector<16x16xi1>, vector<16x16xf32>
    %cst_59 = arith.constant -1.000000e+30 : f32
    %176 = vector.broadcast %cst_59 : f32 to vector<16x16xf32>
    %177 = arith.select %4, %175, %176 : vector<16x16xi1>, vector<16x16xf32>
    %cst_60 = arith.constant dense<0xFF800000> : vector<16xf32>
    %178 = vector.multi_reduction <maximumf>, %177, %cst_60 [1] : vector<16x16xf32> to vector<16xf32>
    %179 = vector.shape_cast %178 : vector<16xf32> to vector<16x1xf32>
    %180 = vector.broadcast %179 : vector<16x1xf32> to vector<16x16xf32>
    %181 = arith.subf %177, %180 : vector<16x16xf32>
    %182 = math.exp %181 : vector<16x16xf32>
    %cst_61 = arith.constant 0.000000e+00 : f32
    %183 = vector.broadcast %cst_61 : f32 to vector<16x16xf32>
    %184 = arith.select %4, %182, %183 : vector<16x16xi1>, vector<16x16xf32>
    %cst_62 = arith.constant dense<0.000000e+00> : vector<16xf32>
    %185 = vector.multi_reduction <add>, %184, %cst_62 [1] : vector<16x16xf32> to vector<16xf32>
    %186 = vector.shape_cast %185 : vector<16xf32> to vector<16x1xf32>
    %187 = tpu.reciprocal %186 {approx = true} : vector<16x1xf32> -> vector<16x1xf32>
    %188 = vector.broadcast %187 : vector<16x1xf32> to vector<16x16xf32>
    %189 = arith.mulf %184, %188 : vector<16x16xf32>
    %190 = vector.extract_strided_slice %9 {offsets = [0, 20], sizes = [16, 4], strides = [1, 1]} : vector<16x32xf32> to vector<16x4xf32>
    %cst_63 = arith.constant dense<0.000000e+00> : vector<16x4xf32>
    %191 = tpu.matmul %189, %190, %cst_63 {dimension_numbers = #tpu.dot_dimension_numbers<[1], [0], [0], [1], [0, 0, 1, 1], [], []>} : vector<16x16xf32>, vector<16x4xf32>, vector<16x4xf32> -> vector<16x4xf32>
    %192 = vector.extract_strided_slice %15 {offsets = [0, 20], sizes = [1, 4], strides = [1, 1]} : vector<1x32xf32> to vector<1x4xf32>
    %193 = vector.broadcast %192 : vector<1x4xf32> to vector<16x4xf32>
    %194 = arith.addf %191, %193 : vector<16x4xf32>
    %c0_64 = arith.constant 0 : index
    %c20 = arith.constant 20 : index
    %195 = vector.load %arg17[%c0_64, %c20] : memref<16x32xf32, #tpu.memory_space<vmem>>, vector<16x4xf32>
    tpu.vector_store %arg17[%c0_64, %c20], %194 {strides = array<i32>} : memref<16x32xf32, #tpu.memory_space<vmem>>, vector<16x4xf32>,
    %196 = vector.extract_strided_slice %11 {offsets = [0, 6], sizes = [16, 1], strides = [1, 1]} : vector<16x8xf32> to vector<16x1xf32>
    %197 = vector.extract_strided_slice %14 {offsets = [6, 0], sizes = [1, 16], strides = [1, 1]} : vector<8x16xf32> to vector<1x16xf32>
    %198 = vector.broadcast %196 : vector<16x1xf32> to vector<16x16xf32>
    %199 = vector.broadcast %197 : vector<1x16xf32> to vector<16x16xf32>
    %200 = arith.addf %198, %199 : vector<16x16xf32>
    %cst_65 = arith.constant 0.000000e+00 : f32
    %201 = vector.broadcast %cst_65 : f32 to vector<16x16xf32>
    %202 = arith.cmpf ogt, %200, %201 : vector<16x16xf32>
    %cst_66 = arith.constant 2.000000e-01 : f32
    %203 = vector.broadcast %cst_66 : f32 to vector<16x16xf32>
    %204 = arith.mulf %203, %200 : vector<16x16xf32>
    %205 = arith.select %202, %200, %204 : vector<16x16xi1>, vector<16x16xf32>
    %cst_67 = arith.constant -1.000000e+30 : f32
    %206 = vector.broadcast %cst_67 : f32 to vector<16x16xf32>
    %207 = arith.select %4, %205, %206 : vector<16x16xi1>, vector<16x16xf32>
    %cst_68 = arith.constant dense<0xFF800000> : vector<16xf32>
    %208 = vector.multi_reduction <maximumf>, %207, %cst_68 [1] : vector<16x16xf32> to vector<16xf32>
    %209 = vector.shape_cast %208 : vector<16xf32> to vector<16x1xf32>
    %210 = vector.broadcast %209 : vector<16x1xf32> to vector<16x16xf32>
    %211 = arith.subf %207, %210 : vector<16x16xf32>
    %212 = math.exp %211 : vector<16x16xf32>
    %cst_69 = arith.constant 0.000000e+00 : f32
    %213 = vector.broadcast %cst_69 : f32 to vector<16x16xf32>
    %214 = arith.select %4, %212, %213 : vector<16x16xi1>, vector<16x16xf32>
    %cst_70 = arith.constant dense<0.000000e+00> : vector<16xf32>
    %215 = vector.multi_reduction <add>, %214, %cst_70 [1] : vector<16x16xf32> to vector<16xf32>
    %216 = vector.shape_cast %215 : vector<16xf32> to vector<16x1xf32>
    %217 = tpu.reciprocal %216 {approx = true} : vector<16x1xf32> -> vector<16x1xf32>
    %218 = vector.broadcast %217 : vector<16x1xf32> to vector<16x16xf32>
    %219 = arith.mulf %214, %218 : vector<16x16xf32>
    %220 = vector.extract_strided_slice %9 {offsets = [0, 24], sizes = [16, 4], strides = [1, 1]} : vector<16x32xf32> to vector<16x4xf32>
    %cst_71 = arith.constant dense<0.000000e+00> : vector<16x4xf32>
    %221 = tpu.matmul %219, %220, %cst_71 {dimension_numbers = #tpu.dot_dimension_numbers<[1], [0], [0], [1], [0, 0, 1, 1], [], []>} : vector<16x16xf32>, vector<16x4xf32>, vector<16x4xf32> -> vector<16x4xf32>
    %222 = vector.extract_strided_slice %15 {offsets = [0, 24], sizes = [1, 4], strides = [1, 1]} : vector<1x32xf32> to vector<1x4xf32>
    %223 = vector.broadcast %222 : vector<1x4xf32> to vector<16x4xf32>
    %224 = arith.addf %221, %223 : vector<16x4xf32>
    %c0_72 = arith.constant 0 : index
    %c24 = arith.constant 24 : index
    %225 = vector.load %arg17[%c0_72, %c24] : memref<16x32xf32, #tpu.memory_space<vmem>>, vector<16x4xf32>
    tpu.vector_store %arg17[%c0_72, %c24], %224 {strides = array<i32>} : memref<16x32xf32, #tpu.memory_space<vmem>>, vector<16x4xf32>,
    %226 = vector.extract_strided_slice %11 {offsets = [0, 7], sizes = [16, 1], strides = [1, 1]} : vector<16x8xf32> to vector<16x1xf32>
    %227 = vector.extract_strided_slice %14 {offsets = [7, 0], sizes = [1, 16], strides = [1, 1]} : vector<8x16xf32> to vector<1x16xf32>
    %228 = vector.broadcast %226 : vector<16x1xf32> to vector<16x16xf32>
    %229 = vector.broadcast %227 : vector<1x16xf32> to vector<16x16xf32>
    %230 = arith.addf %228, %229 : vector<16x16xf32>
    %cst_73 = arith.constant 0.000000e+00 : f32
    %231 = vector.broadcast %cst_73 : f32 to vector<16x16xf32>
    %232 = arith.cmpf ogt, %230, %231 : vector<16x16xf32>
    %cst_74 = arith.constant 2.000000e-01 : f32
    %233 = vector.broadcast %cst_74 : f32 to vector<16x16xf32>
    %234 = arith.mulf %233, %230 : vector<16x16xf32>
    %235 = arith.select %232, %230, %234 : vector<16x16xi1>, vector<16x16xf32>
    %cst_75 = arith.constant -1.000000e+30 : f32
    %236 = vector.broadcast %cst_75 : f32 to vector<16x16xf32>
    %237 = arith.select %4, %235, %236 : vector<16x16xi1>, vector<16x16xf32>
    %cst_76 = arith.constant dense<0xFF800000> : vector<16xf32>
    %238 = vector.multi_reduction <maximumf>, %237, %cst_76 [1] : vector<16x16xf32> to vector<16xf32>
    %239 = vector.shape_cast %238 : vector<16xf32> to vector<16x1xf32>
    %240 = vector.broadcast %239 : vector<16x1xf32> to vector<16x16xf32>
    %241 = arith.subf %237, %240 : vector<16x16xf32>
    %242 = math.exp %241 : vector<16x16xf32>
    %cst_77 = arith.constant 0.000000e+00 : f32
    %243 = vector.broadcast %cst_77 : f32 to vector<16x16xf32>
    %244 = arith.select %4, %242, %243 : vector<16x16xi1>, vector<16x16xf32>
    %cst_78 = arith.constant dense<0.000000e+00> : vector<16xf32>
    %245 = vector.multi_reduction <add>, %244, %cst_78 [1] : vector<16x16xf32> to vector<16xf32>
    %246 = vector.shape_cast %245 : vector<16xf32> to vector<16x1xf32>
    %247 = tpu.reciprocal %246 {approx = true} : vector<16x1xf32> -> vector<16x1xf32>
    %248 = vector.broadcast %247 : vector<16x1xf32> to vector<16x16xf32>
    %249 = arith.mulf %244, %248 : vector<16x16xf32>
    %250 = vector.extract_strided_slice %9 {offsets = [0, 28], sizes = [16, 4], strides = [1, 1]} : vector<16x32xf32> to vector<16x4xf32>
    %cst_79 = arith.constant dense<0.000000e+00> : vector<16x4xf32>
    %251 = tpu.matmul %249, %250, %cst_79 {dimension_numbers = #tpu.dot_dimension_numbers<[1], [0], [0], [1], [0, 0, 1, 1], [], []>} : vector<16x16xf32>, vector<16x4xf32>, vector<16x4xf32> -> vector<16x4xf32>
    %252 = vector.extract_strided_slice %15 {offsets = [0, 28], sizes = [1, 4], strides = [1, 1]} : vector<1x32xf32> to vector<1x4xf32>
    %253 = vector.broadcast %252 : vector<1x4xf32> to vector<16x4xf32>
    %254 = arith.addf %251, %253 : vector<16x4xf32>
    %c0_80 = arith.constant 0 : index
    %c28 = arith.constant 28 : index
    %255 = vector.load %arg17[%c0_80, %c28] : memref<16x32xf32, #tpu.memory_space<vmem>>, vector<16x4xf32>
    tpu.vector_store %arg17[%c0_80, %c28], %254 {strides = array<i32>} : memref<16x32xf32, #tpu.memory_space<vmem>>, vector<16x4xf32>,
    %c0_81 = arith.constant 0 : index
    %c0_82 = arith.constant 0 : index
    %256 = vector.load %arg17[%c0_81, %c0_82] : memref<16x32xf32, #tpu.memory_space<vmem>>, vector<16x32xf32>
    %c0_83 = arith.constant 0 : index
    %c0_84 = arith.constant 0 : index
    %257 = vector.load %arg7[%c0_83, %c0_84] : memref<32x16xf32, #tpu.memory_space<vmem>>, vector<32x16xf32>
    %cst_85 = arith.constant dense<0.000000e+00> : vector<16x16xf32>
    %258 = tpu.matmul %256, %257, %cst_85 {dimension_numbers = #tpu.dot_dimension_numbers<[1], [0], [0], [1], [0, 0, 1, 1], [], []>} : vector<16x32xf32>, vector<32x16xf32>, vector<16x16xf32> -> vector<16x16xf32>
    %c0_86 = arith.constant 0 : index
    %c0_87 = arith.constant 0 : index
    %259 = vector.load %arg9[%c0_86, %c0_87] : memref<16x4xf32, #tpu.memory_space<vmem>>, vector<16x4xf32>
    %cst_88 = arith.constant dense<0.000000e+00> : vector<16x4xf32>
    %260 = tpu.matmul %258, %259, %cst_88 {dimension_numbers = #tpu.dot_dimension_numbers<[1], [0], [0], [1], [0, 0, 1, 1], [], []>} : vector<16x16xf32>, vector<16x4xf32>, vector<16x4xf32> -> vector<16x4xf32>
    %c0_89 = arith.constant 0 : index
    %c0_90 = arith.constant 0 : index
    %261 = vector.load %arg8[%c0_89, %c0_90] : memref<16x4xf32, #tpu.memory_space<vmem>>, vector<16x4xf32>
    %cst_91 = arith.constant dense<0.000000e+00> : vector<16x4xf32>
    %262 = tpu.matmul %258, %261, %cst_91 {dimension_numbers = #tpu.dot_dimension_numbers<[1], [0], [0], [1], [0, 0, 1, 1], [], []>} : vector<16x16xf32>, vector<16x4xf32>, vector<16x4xf32> -> vector<16x4xf32>
    %263 = tpu.transpose %262, [1, 0] : vector<16x4xf32> -> vector<4x16xf32>
    %c0_92 = arith.constant 0 : index
    %c0_93 = arith.constant 0 : index
    %264 = vector.load %arg10[%c0_92, %c0_93] : memref<1x16xf32, #tpu.memory_space<vmem>>, vector<1x16xf32>
    %265 = vector.extract_strided_slice %260 {offsets = [0, 0], sizes = [16, 1], strides = [1, 1]} : vector<16x4xf32> to vector<16x1xf32>
    %266 = vector.extract_strided_slice %263 {offsets = [0, 0], sizes = [1, 16], strides = [1, 1]} : vector<4x16xf32> to vector<1x16xf32>
    %267 = vector.broadcast %265 : vector<16x1xf32> to vector<16x16xf32>
    %268 = vector.broadcast %266 : vector<1x16xf32> to vector<16x16xf32>
    %269 = arith.addf %267, %268 : vector<16x16xf32>
    %cst_94 = arith.constant 0.000000e+00 : f32
    %270 = vector.broadcast %cst_94 : f32 to vector<16x16xf32>
    %271 = arith.cmpf ogt, %269, %270 : vector<16x16xf32>
    %cst_95 = arith.constant 2.000000e-01 : f32
    %272 = vector.broadcast %cst_95 : f32 to vector<16x16xf32>
    %273 = arith.mulf %272, %269 : vector<16x16xf32>
    %274 = arith.select %271, %269, %273 : vector<16x16xi1>, vector<16x16xf32>
    %cst_96 = arith.constant -1.000000e+30 : f32
    %275 = vector.broadcast %cst_96 : f32 to vector<16x16xf32>
    %276 = arith.select %4, %274, %275 : vector<16x16xi1>, vector<16x16xf32>
    %cst_97 = arith.constant dense<0xFF800000> : vector<16xf32>
    %277 = vector.multi_reduction <maximumf>, %276, %cst_97 [1] : vector<16x16xf32> to vector<16xf32>
    %278 = vector.shape_cast %277 : vector<16xf32> to vector<16x1xf32>
    %279 = vector.broadcast %278 : vector<16x1xf32> to vector<16x16xf32>
    %280 = arith.subf %276, %279 : vector<16x16xf32>
    %281 = math.exp %280 : vector<16x16xf32>
    %cst_98 = arith.constant 0.000000e+00 : f32
    %282 = vector.broadcast %cst_98 : f32 to vector<16x16xf32>
    %283 = arith.select %4, %281, %282 : vector<16x16xi1>, vector<16x16xf32>
    %cst_99 = arith.constant dense<0.000000e+00> : vector<16xf32>
    %284 = vector.multi_reduction <add>, %283, %cst_99 [1] : vector<16x16xf32> to vector<16xf32>
    %285 = vector.shape_cast %284 : vector<16xf32> to vector<16x1xf32>
    %286 = tpu.reciprocal %285 {approx = true} : vector<16x1xf32> -> vector<16x1xf32>
    %287 = vector.broadcast %286 : vector<16x1xf32> to vector<16x16xf32>
    %288 = arith.mulf %283, %287 : vector<16x16xf32>
    %289 = vector.extract_strided_slice %258 {offsets = [0, 0], sizes = [16, 4], strides = [1, 1]} : vector<16x16xf32> to vector<16x4xf32>
    %cst_100 = arith.constant dense<0.000000e+00> : vector<16x4xf32>
    %290 = tpu.matmul %288, %289, %cst_100 {dimension_numbers = #tpu.dot_dimension_numbers<[1], [0], [0], [1], [0, 0, 1, 1], [], []>} : vector<16x16xf32>, vector<16x4xf32>, vector<16x4xf32> -> vector<16x4xf32>
    %291 = vector.extract_strided_slice %264 {offsets = [0, 0], sizes = [1, 4], strides = [1, 1]} : vector<1x16xf32> to vector<1x4xf32>
    %292 = vector.broadcast %291 : vector<1x4xf32> to vector<16x4xf32>
    %293 = arith.addf %290, %292 : vector<16x4xf32>
    %c0_101 = arith.constant 0 : index
    %c0_102 = arith.constant 0 : index
    %294 = vector.load %arg18[%c0_101, %c0_102] : memref<16x16xf32, #tpu.memory_space<vmem>>, vector<16x4xf32>
    tpu.vector_store %arg18[%c0_101, %c0_102], %293 {strides = array<i32>} : memref<16x16xf32, #tpu.memory_space<vmem>>, vector<16x4xf32>,
    %295 = vector.extract_strided_slice %260 {offsets = [0, 1], sizes = [16, 1], strides = [1, 1]} : vector<16x4xf32> to vector<16x1xf32>
    %296 = vector.extract_strided_slice %263 {offsets = [1, 0], sizes = [1, 16], strides = [1, 1]} : vector<4x16xf32> to vector<1x16xf32>
    %297 = vector.broadcast %295 : vector<16x1xf32> to vector<16x16xf32>
    %298 = vector.broadcast %296 : vector<1x16xf32> to vector<16x16xf32>
    %299 = arith.addf %297, %298 : vector<16x16xf32>
    %cst_103 = arith.constant 0.000000e+00 : f32
    %300 = vector.broadcast %cst_103 : f32 to vector<16x16xf32>
    %301 = arith.cmpf ogt, %299, %300 : vector<16x16xf32>
    %cst_104 = arith.constant 2.000000e-01 : f32
    %302 = vector.broadcast %cst_104 : f32 to vector<16x16xf32>
    %303 = arith.mulf %302, %299 : vector<16x16xf32>
    %304 = arith.select %301, %299, %303 : vector<16x16xi1>, vector<16x16xf32>
    %cst_105 = arith.constant -1.000000e+30 : f32
    %305 = vector.broadcast %cst_105 : f32 to vector<16x16xf32>
    %306 = arith.select %4, %304, %305 : vector<16x16xi1>, vector<16x16xf32>
    %cst_106 = arith.constant dense<0xFF800000> : vector<16xf32>
    %307 = vector.multi_reduction <maximumf>, %306, %cst_106 [1] : vector<16x16xf32> to vector<16xf32>
    %308 = vector.shape_cast %307 : vector<16xf32> to vector<16x1xf32>
    %309 = vector.broadcast %308 : vector<16x1xf32> to vector<16x16xf32>
    %310 = arith.subf %306, %309 : vector<16x16xf32>
    %311 = math.exp %310 : vector<16x16xf32>
    %cst_107 = arith.constant 0.000000e+00 : f32
    %312 = vector.broadcast %cst_107 : f32 to vector<16x16xf32>
    %313 = arith.select %4, %311, %312 : vector<16x16xi1>, vector<16x16xf32>
    %cst_108 = arith.constant dense<0.000000e+00> : vector<16xf32>
    %314 = vector.multi_reduction <add>, %313, %cst_108 [1] : vector<16x16xf32> to vector<16xf32>
    %315 = vector.shape_cast %314 : vector<16xf32> to vector<16x1xf32>
    %316 = tpu.reciprocal %315 {approx = true} : vector<16x1xf32> -> vector<16x1xf32>
    %317 = vector.broadcast %316 : vector<16x1xf32> to vector<16x16xf32>
    %318 = arith.mulf %313, %317 : vector<16x16xf32>
    %319 = vector.extract_strided_slice %258 {offsets = [0, 4], sizes = [16, 4], strides = [1, 1]} : vector<16x16xf32> to vector<16x4xf32>
    %cst_109 = arith.constant dense<0.000000e+00> : vector<16x4xf32>
    %320 = tpu.matmul %318, %319, %cst_109 {dimension_numbers = #tpu.dot_dimension_numbers<[1], [0], [0], [1], [0, 0, 1, 1], [], []>} : vector<16x16xf32>, vector<16x4xf32>, vector<16x4xf32> -> vector<16x4xf32>
    %321 = vector.extract_strided_slice %264 {offsets = [0, 4], sizes = [1, 4], strides = [1, 1]} : vector<1x16xf32> to vector<1x4xf32>
    %322 = vector.broadcast %321 : vector<1x4xf32> to vector<16x4xf32>
    %323 = arith.addf %320, %322 : vector<16x4xf32>
    %c0_110 = arith.constant 0 : index
    %c4_111 = arith.constant 4 : index
    %324 = vector.load %arg18[%c0_110, %c4_111] : memref<16x16xf32, #tpu.memory_space<vmem>>, vector<16x4xf32>
    tpu.vector_store %arg18[%c0_110, %c4_111], %323 {strides = array<i32>} : memref<16x16xf32, #tpu.memory_space<vmem>>, vector<16x4xf32>,
    %325 = vector.extract_strided_slice %260 {offsets = [0, 2], sizes = [16, 1], strides = [1, 1]} : vector<16x4xf32> to vector<16x1xf32>
    %326 = vector.extract_strided_slice %263 {offsets = [2, 0], sizes = [1, 16], strides = [1, 1]} : vector<4x16xf32> to vector<1x16xf32>
    %327 = vector.broadcast %325 : vector<16x1xf32> to vector<16x16xf32>
    %328 = vector.broadcast %326 : vector<1x16xf32> to vector<16x16xf32>
    %329 = arith.addf %327, %328 : vector<16x16xf32>
    %cst_112 = arith.constant 0.000000e+00 : f32
    %330 = vector.broadcast %cst_112 : f32 to vector<16x16xf32>
    %331 = arith.cmpf ogt, %329, %330 : vector<16x16xf32>
    %cst_113 = arith.constant 2.000000e-01 : f32
    %332 = vector.broadcast %cst_113 : f32 to vector<16x16xf32>
    %333 = arith.mulf %332, %329 : vector<16x16xf32>
    %334 = arith.select %331, %329, %333 : vector<16x16xi1>, vector<16x16xf32>
    %cst_114 = arith.constant -1.000000e+30 : f32
    %335 = vector.broadcast %cst_114 : f32 to vector<16x16xf32>
    %336 = arith.select %4, %334, %335 : vector<16x16xi1>, vector<16x16xf32>
    %cst_115 = arith.constant dense<0xFF800000> : vector<16xf32>
    %337 = vector.multi_reduction <maximumf>, %336, %cst_115 [1] : vector<16x16xf32> to vector<16xf32>
    %338 = vector.shape_cast %337 : vector<16xf32> to vector<16x1xf32>
    %339 = vector.broadcast %338 : vector<16x1xf32> to vector<16x16xf32>
    %340 = arith.subf %336, %339 : vector<16x16xf32>
    %341 = math.exp %340 : vector<16x16xf32>
    %cst_116 = arith.constant 0.000000e+00 : f32
    %342 = vector.broadcast %cst_116 : f32 to vector<16x16xf32>
    %343 = arith.select %4, %341, %342 : vector<16x16xi1>, vector<16x16xf32>
    %cst_117 = arith.constant dense<0.000000e+00> : vector<16xf32>
    %344 = vector.multi_reduction <add>, %343, %cst_117 [1] : vector<16x16xf32> to vector<16xf32>
    %345 = vector.shape_cast %344 : vector<16xf32> to vector<16x1xf32>
    %346 = tpu.reciprocal %345 {approx = true} : vector<16x1xf32> -> vector<16x1xf32>
    %347 = vector.broadcast %346 : vector<16x1xf32> to vector<16x16xf32>
    %348 = arith.mulf %343, %347 : vector<16x16xf32>
    %349 = vector.extract_strided_slice %258 {offsets = [0, 8], sizes = [16, 4], strides = [1, 1]} : vector<16x16xf32> to vector<16x4xf32>
    %cst_118 = arith.constant dense<0.000000e+00> : vector<16x4xf32>
    %350 = tpu.matmul %348, %349, %cst_118 {dimension_numbers = #tpu.dot_dimension_numbers<[1], [0], [0], [1], [0, 0, 1, 1], [], []>} : vector<16x16xf32>, vector<16x4xf32>, vector<16x4xf32> -> vector<16x4xf32>
    %351 = vector.extract_strided_slice %264 {offsets = [0, 8], sizes = [1, 4], strides = [1, 1]} : vector<1x16xf32> to vector<1x4xf32>
    %352 = vector.broadcast %351 : vector<1x4xf32> to vector<16x4xf32>
    %353 = arith.addf %350, %352 : vector<16x4xf32>
    %c0_119 = arith.constant 0 : index
    %c8_120 = arith.constant 8 : index
    %354 = vector.load %arg18[%c0_119, %c8_120] : memref<16x16xf32, #tpu.memory_space<vmem>>, vector<16x4xf32>
    tpu.vector_store %arg18[%c0_119, %c8_120], %353 {strides = array<i32>} : memref<16x16xf32, #tpu.memory_space<vmem>>, vector<16x4xf32>,
    %355 = vector.extract_strided_slice %260 {offsets = [0, 3], sizes = [16, 1], strides = [1, 1]} : vector<16x4xf32> to vector<16x1xf32>
    %356 = vector.extract_strided_slice %263 {offsets = [3, 0], sizes = [1, 16], strides = [1, 1]} : vector<4x16xf32> to vector<1x16xf32>
    %357 = vector.broadcast %355 : vector<16x1xf32> to vector<16x16xf32>
    %358 = vector.broadcast %356 : vector<1x16xf32> to vector<16x16xf32>
    %359 = arith.addf %357, %358 : vector<16x16xf32>
    %cst_121 = arith.constant 0.000000e+00 : f32
    %360 = vector.broadcast %cst_121 : f32 to vector<16x16xf32>
    %361 = arith.cmpf ogt, %359, %360 : vector<16x16xf32>
    %cst_122 = arith.constant 2.000000e-01 : f32
    %362 = vector.broadcast %cst_122 : f32 to vector<16x16xf32>
    %363 = arith.mulf %362, %359 : vector<16x16xf32>
    %364 = arith.select %361, %359, %363 : vector<16x16xi1>, vector<16x16xf32>
    %cst_123 = arith.constant -1.000000e+30 : f32
    %365 = vector.broadcast %cst_123 : f32 to vector<16x16xf32>
    %366 = arith.select %4, %364, %365 : vector<16x16xi1>, vector<16x16xf32>
    %cst_124 = arith.constant dense<0xFF800000> : vector<16xf32>
    %367 = vector.multi_reduction <maximumf>, %366, %cst_124 [1] : vector<16x16xf32> to vector<16xf32>
    %368 = vector.shape_cast %367 : vector<16xf32> to vector<16x1xf32>
    %369 = vector.broadcast %368 : vector<16x1xf32> to vector<16x16xf32>
    %370 = arith.subf %366, %369 : vector<16x16xf32>
    %371 = math.exp %370 : vector<16x16xf32>
    %cst_125 = arith.constant 0.000000e+00 : f32
    %372 = vector.broadcast %cst_125 : f32 to vector<16x16xf32>
    %373 = arith.select %4, %371, %372 : vector<16x16xi1>, vector<16x16xf32>
    %cst_126 = arith.constant dense<0.000000e+00> : vector<16xf32>
    %374 = vector.multi_reduction <add>, %373, %cst_126 [1] : vector<16x16xf32> to vector<16xf32>
    %375 = vector.shape_cast %374 : vector<16xf32> to vector<16x1xf32>
    %376 = tpu.reciprocal %375 {approx = true} : vector<16x1xf32> -> vector<16x1xf32>
    %377 = vector.broadcast %376 : vector<16x1xf32> to vector<16x16xf32>
    %378 = arith.mulf %373, %377 : vector<16x16xf32>
    %379 = vector.extract_strided_slice %258 {offsets = [0, 12], sizes = [16, 4], strides = [1, 1]} : vector<16x16xf32> to vector<16x4xf32>
    %cst_127 = arith.constant dense<0.000000e+00> : vector<16x4xf32>
    %380 = tpu.matmul %378, %379, %cst_127 {dimension_numbers = #tpu.dot_dimension_numbers<[1], [0], [0], [1], [0, 0, 1, 1], [], []>} : vector<16x16xf32>, vector<16x4xf32>, vector<16x4xf32> -> vector<16x4xf32>
    %381 = vector.extract_strided_slice %264 {offsets = [0, 12], sizes = [1, 4], strides = [1, 1]} : vector<1x16xf32> to vector<1x4xf32>
    %382 = vector.broadcast %381 : vector<1x4xf32> to vector<16x4xf32>
    %383 = arith.addf %380, %382 : vector<16x4xf32>
    %c0_128 = arith.constant 0 : index
    %c12_129 = arith.constant 12 : index
    %384 = vector.load %arg18[%c0_128, %c12_129] : memref<16x16xf32, #tpu.memory_space<vmem>>, vector<16x4xf32>
    tpu.vector_store %arg18[%c0_128, %c12_129], %383 {strides = array<i32>} : memref<16x16xf32, #tpu.memory_space<vmem>>, vector<16x4xf32>,
    %c0_130 = arith.constant 0 : index
    %c0_131 = arith.constant 0 : index
    %385 = vector.load %arg18[%c0_130, %c0_131] : memref<16x16xf32, #tpu.memory_space<vmem>>, vector<16x16xf32>
    %c0_132 = arith.constant 0 : index
    %c0_133 = arith.constant 0 : index
    %386 = vector.load %arg11[%c0_132, %c0_133] : memref<16x8xf32, #tpu.memory_space<vmem>>, vector<16x8xf32>
    %cst_134 = arith.constant dense<0.000000e+00> : vector<16x8xf32>
    %387 = tpu.matmul %385, %386, %cst_134 {dimension_numbers = #tpu.dot_dimension_numbers<[1], [0], [0], [1], [0, 0, 1, 1], [], []>} : vector<16x16xf32>, vector<16x8xf32>, vector<16x8xf32> -> vector<16x8xf32>
    %c0_135 = arith.constant 0 : index
    %c0_136 = arith.constant 0 : index
    %388 = vector.load %arg13[%c0_135, %c0_136] : memref<8x2xf32, #tpu.memory_space<vmem>>, vector<8x2xf32>
    %cst_137 = arith.constant dense<0.000000e+00> : vector<16x2xf32>
    %389 = tpu.matmul %387, %388, %cst_137 {dimension_numbers = #tpu.dot_dimension_numbers<[1], [0], [0], [1], [0, 0, 1, 1], [], []>} : vector<16x8xf32>, vector<8x2xf32>, vector<16x2xf32> -> vector<16x2xf32>
    %c0_138 = arith.constant 0 : index
    %c0_139 = arith.constant 0 : index
    %390 = vector.load %arg12[%c0_138, %c0_139] : memref<8x2xf32, #tpu.memory_space<vmem>>, vector<8x2xf32>
    %cst_140 = arith.constant dense<0.000000e+00> : vector<16x2xf32>
    %391 = tpu.matmul %387, %390, %cst_140 {dimension_numbers = #tpu.dot_dimension_numbers<[1], [0], [0], [1], [0, 0, 1, 1], [], []>} : vector<16x8xf32>, vector<8x2xf32>, vector<16x2xf32> -> vector<16x2xf32>
    %392 = tpu.transpose %391, [1, 0] : vector<16x2xf32> -> vector<2x16xf32>
    %c0_141 = arith.constant 0 : index
    %c0_142 = arith.constant 0 : index
    %393 = vector.load %arg14[%c0_141, %c0_142] : memref<1x8xf32, #tpu.memory_space<vmem>>, vector<1x8xf32>
    %394 = vector.extract_strided_slice %389 {offsets = [0, 0], sizes = [16, 1], strides = [1, 1]} : vector<16x2xf32> to vector<16x1xf32>
    %395 = vector.extract_strided_slice %392 {offsets = [0, 0], sizes = [1, 16], strides = [1, 1]} : vector<2x16xf32> to vector<1x16xf32>
    %396 = vector.broadcast %394 : vector<16x1xf32> to vector<16x16xf32>
    %397 = vector.broadcast %395 : vector<1x16xf32> to vector<16x16xf32>
    %398 = arith.addf %396, %397 : vector<16x16xf32>
    %cst_143 = arith.constant 0.000000e+00 : f32
    %399 = vector.broadcast %cst_143 : f32 to vector<16x16xf32>
    %400 = arith.cmpf ogt, %398, %399 : vector<16x16xf32>
    %cst_144 = arith.constant 2.000000e-01 : f32
    %401 = vector.broadcast %cst_144 : f32 to vector<16x16xf32>
    %402 = arith.mulf %401, %398 : vector<16x16xf32>
    %403 = arith.select %400, %398, %402 : vector<16x16xi1>, vector<16x16xf32>
    %cst_145 = arith.constant -1.000000e+30 : f32
    %404 = vector.broadcast %cst_145 : f32 to vector<16x16xf32>
    %405 = arith.select %4, %403, %404 : vector<16x16xi1>, vector<16x16xf32>
    %cst_146 = arith.constant dense<0xFF800000> : vector<16xf32>
    %406 = vector.multi_reduction <maximumf>, %405, %cst_146 [1] : vector<16x16xf32> to vector<16xf32>
    %407 = vector.shape_cast %406 : vector<16xf32> to vector<16x1xf32>
    %408 = vector.broadcast %407 : vector<16x1xf32> to vector<16x16xf32>
    %409 = arith.subf %405, %408 : vector<16x16xf32>
    %410 = math.exp %409 : vector<16x16xf32>
    %cst_147 = arith.constant 0.000000e+00 : f32
    %411 = vector.broadcast %cst_147 : f32 to vector<16x16xf32>
    %412 = arith.select %4, %410, %411 : vector<16x16xi1>, vector<16x16xf32>
    %cst_148 = arith.constant dense<0.000000e+00> : vector<16xf32>
    %413 = vector.multi_reduction <add>, %412, %cst_148 [1] : vector<16x16xf32> to vector<16xf32>
    %414 = vector.shape_cast %413 : vector<16xf32> to vector<16x1xf32>
    %415 = tpu.reciprocal %414 {approx = true} : vector<16x1xf32> -> vector<16x1xf32>
    %416 = vector.broadcast %415 : vector<16x1xf32> to vector<16x16xf32>
    %417 = arith.mulf %412, %416 : vector<16x16xf32>
    %418 = vector.extract_strided_slice %387 {offsets = [0, 0], sizes = [16, 4], strides = [1, 1]} : vector<16x8xf32> to vector<16x4xf32>
    %cst_149 = arith.constant dense<0.000000e+00> : vector<16x4xf32>
    %419 = tpu.matmul %417, %418, %cst_149 {dimension_numbers = #tpu.dot_dimension_numbers<[1], [0], [0], [1], [0, 0, 1, 1], [], []>} : vector<16x16xf32>, vector<16x4xf32>, vector<16x4xf32> -> vector<16x4xf32>
    %420 = vector.extract_strided_slice %393 {offsets = [0, 0], sizes = [1, 4], strides = [1, 1]} : vector<1x8xf32> to vector<1x4xf32>
    %421 = vector.broadcast %420 : vector<1x4xf32> to vector<16x4xf32>
    %422 = arith.addf %419, %421 : vector<16x4xf32>
    %c0_150 = arith.constant 0 : index
    %c0_151 = arith.constant 0 : index
    %423 = vector.load %arg19[%c0_150, %c0_151] : memref<16x8xf32, #tpu.memory_space<vmem>>, vector<16x4xf32>
    tpu.vector_store %arg19[%c0_150, %c0_151], %422 {strides = array<i32>} : memref<16x8xf32, #tpu.memory_space<vmem>>, vector<16x4xf32>,
    %424 = vector.extract_strided_slice %389 {offsets = [0, 1], sizes = [16, 1], strides = [1, 1]} : vector<16x2xf32> to vector<16x1xf32>
    %425 = vector.extract_strided_slice %392 {offsets = [1, 0], sizes = [1, 16], strides = [1, 1]} : vector<2x16xf32> to vector<1x16xf32>
    %426 = vector.broadcast %424 : vector<16x1xf32> to vector<16x16xf32>
    %427 = vector.broadcast %425 : vector<1x16xf32> to vector<16x16xf32>
    %428 = arith.addf %426, %427 : vector<16x16xf32>
    %cst_152 = arith.constant 0.000000e+00 : f32
    %429 = vector.broadcast %cst_152 : f32 to vector<16x16xf32>
    %430 = arith.cmpf ogt, %428, %429 : vector<16x16xf32>
    %cst_153 = arith.constant 2.000000e-01 : f32
    %431 = vector.broadcast %cst_153 : f32 to vector<16x16xf32>
    %432 = arith.mulf %431, %428 : vector<16x16xf32>
    %433 = arith.select %430, %428, %432 : vector<16x16xi1>, vector<16x16xf32>
    %cst_154 = arith.constant -1.000000e+30 : f32
    %434 = vector.broadcast %cst_154 : f32 to vector<16x16xf32>
    %435 = arith.select %4, %433, %434 : vector<16x16xi1>, vector<16x16xf32>
    %cst_155 = arith.constant dense<0xFF800000> : vector<16xf32>
    %436 = vector.multi_reduction <maximumf>, %435, %cst_155 [1] : vector<16x16xf32> to vector<16xf32>
    %437 = vector.shape_cast %436 : vector<16xf32> to vector<16x1xf32>
    %438 = vector.broadcast %437 : vector<16x1xf32> to vector<16x16xf32>
    %439 = arith.subf %435, %438 : vector<16x16xf32>
    %440 = math.exp %439 : vector<16x16xf32>
    %cst_156 = arith.constant 0.000000e+00 : f32
    %441 = vector.broadcast %cst_156 : f32 to vector<16x16xf32>
    %442 = arith.select %4, %440, %441 : vector<16x16xi1>, vector<16x16xf32>
    %cst_157 = arith.constant dense<0.000000e+00> : vector<16xf32>
    %443 = vector.multi_reduction <add>, %442, %cst_157 [1] : vector<16x16xf32> to vector<16xf32>
    %444 = vector.shape_cast %443 : vector<16xf32> to vector<16x1xf32>
    %445 = tpu.reciprocal %444 {approx = true} : vector<16x1xf32> -> vector<16x1xf32>
    %446 = vector.broadcast %445 : vector<16x1xf32> to vector<16x16xf32>
    %447 = arith.mulf %442, %446 : vector<16x16xf32>
    %448 = vector.extract_strided_slice %387 {offsets = [0, 4], sizes = [16, 4], strides = [1, 1]} : vector<16x8xf32> to vector<16x4xf32>
    %cst_158 = arith.constant dense<0.000000e+00> : vector<16x4xf32>
    %449 = tpu.matmul %447, %448, %cst_158 {dimension_numbers = #tpu.dot_dimension_numbers<[1], [0], [0], [1], [0, 0, 1, 1], [], []>} : vector<16x16xf32>, vector<16x4xf32>, vector<16x4xf32> -> vector<16x4xf32>
    %450 = vector.extract_strided_slice %393 {offsets = [0, 4], sizes = [1, 4], strides = [1, 1]} : vector<1x8xf32> to vector<1x4xf32>
    %451 = vector.broadcast %450 : vector<1x4xf32> to vector<16x4xf32>
    %452 = arith.addf %449, %451 : vector<16x4xf32>
    %c0_159 = arith.constant 0 : index
    %c4_160 = arith.constant 4 : index
    %453 = vector.load %arg19[%c0_159, %c4_160] : memref<16x8xf32, #tpu.memory_space<vmem>>, vector<16x4xf32>
    tpu.vector_store %arg19[%c0_159, %c4_160], %452 {strides = array<i32>} : memref<16x8xf32, #tpu.memory_space<vmem>>, vector<16x4xf32>,
    %c0_161 = arith.constant 0 : index
    %c0_162 = arith.constant 0 : index
    %454 = vector.load %arg19[%c0_161, %c0_162] : memref<16x8xf32, #tpu.memory_space<vmem>>, vector<16x8xf32>
    %cst_163 = arith.constant dense<0.000000e+00> : vector<16xf32>
    %455 = vector.multi_reduction <add>, %1, %cst_163 [1] : vector<16x16xf32> to vector<16xf32>
    %456 = vector.shape_cast %455 : vector<16xf32> to vector<16x1xf32>
    %457 = tpu.reciprocal %456 {approx = true} : vector<16x1xf32> -> vector<16x1xf32>
    %458 = vector.broadcast %457 : vector<16x1xf32> to vector<16x16xf32>
    %459 = arith.mulf %1, %458 : vector<16x16xf32>
    %cst_164 = arith.constant dense<0.000000e+00> : vector<16x8xf32>
    %460 = tpu.matmul %459, %454, %cst_164 {dimension_numbers = #tpu.dot_dimension_numbers<[1], [0], [0], [1], [0, 0, 1, 1], [], []>} : vector<16x16xf32>, vector<16x8xf32>, vector<16x8xf32> -> vector<16x8xf32>
    %461 = arith.mulf %454, %460 : vector<16x8xf32>
    %cst_165 = arith.constant dense<0.000000e+00> : vector<16xf32>
    %462 = vector.multi_reduction <add>, %461, %cst_165 [1] : vector<16x8xf32> to vector<16xf32>
    %463 = vector.shape_cast %462 : vector<16xf32> to vector<16x1xf32>
    %464 = vector.extract_strided_slice %0 {offsets = [0, 0], sizes = [16, 1], strides = [1, 1]} : vector<16x5xf32> to vector<16x1xf32>
    %465 = arith.addf %463, %464 : vector<16x1xf32>
    %c0_166 = arith.constant 0 : index
    %c0_167 = arith.constant 0 : index
    %466 = vector.load %arg15[%c0_166, %c0_167] : memref<8x1xf32, #tpu.memory_space<vmem>>, vector<8x1xf32>
    %cst_168 = arith.constant dense<0.000000e+00> : vector<16x1xf32>
    %467 = tpu.matmul %460, %466, %cst_168 {dimension_numbers = #tpu.dot_dimension_numbers<[1], [0], [0], [1], [0, 0, 1, 1], [], []>} : vector<16x8xf32>, vector<8x1xf32>, vector<16x1xf32> -> vector<16x1xf32>
    %468 = arith.addf %465, %467 : vector<16x1xf32>
    %c0_169 = arith.constant 0 : index
    %c0_170 = arith.constant 0 : index
    %469 = vector.load %arg16[%c0_169, %c0_170] : memref<16x1xf32, #tpu.memory_space<vmem>>, vector<16x1xf32>
    tpu.vector_store %arg16[%c0_169, %c0_170], %468 {strides = array<i32>} : memref<16x1xf32, #tpu.memory_space<vmem>>, vector<16x1xf32>,
    return
  }
}

</mosaic_0001>

<llo_original>
// kernel: nirm_forward.1
$region0: #{nirm_forward.1}
  #allocation0 [shape = 'u32[]', space=smem, size = 0x4, offset = 0x4, fixed_abs, tag = 'smem constant byte address 0x4 - core index']
  #allocation1 [shape = 'u32[72,128]{1,0:T(1,128)}', space=vmem, size = 0x9000, scoped, tag = 'internal scratch']
  #allocation2 [shape = 'f32[16,32]{1,0:T(8,128)}', space=vmem, size = 0x2000, scoped, tag = 'scratch operand']
  #allocation3 [shape = 'f32[16,16]{1,0:T(8,128)}', space=vmem, size = 0x2000, scoped, tag = 'scratch operand']
  #allocation4 [shape = 'f32[16,8]{1,0:T(8,128)}', space=vmem, size = 0x2000, scoped, tag = 'scratch operand']
  %s0 = inlined_call_operand.vmem [shape: f32[16,5], index: 0, kind: input, shape index: {}]
  %s1 = inlined_call_operand.vmem [shape: f32[16,16], index: 1, kind: input, shape index: {}]
  %s2 = inlined_call_operand.vmem [shape: f32[5,32], index: 2, kind: input, shape index: {}]
  %s3 = inlined_call_operand.vmem [shape: f32[1,32], index: 3, kind: input, shape index: {}]
  %s4 = inlined_call_operand.vmem [shape: f32[32,8], index: 4, kind: input, shape index: {}]
  %s5 = inlined_call_operand.vmem [shape: f32[32,8], index: 5, kind: input, shape index: {}]
  %s6 = inlined_call_operand.vmem [shape: f32[1,32], index: 6, kind: input, shape index: {}]
  %s7 = inlined_call_operand.vmem [shape: f32[32,16], index: 7, kind: input, shape index: {}]
  %s8 = inlined_call_operand.vmem [shape: f32[16,4], index: 8, kind: input, shape index: {}]
  %s9 = inlined_call_operand.vmem [shape: f32[16,4], index: 9, kind: input, shape index: {}]
  %s10 = inlined_call_operand.vmem [shape: f32[1,16], index: 10, kind: input, shape index: {}]
  %s11 = inlined_call_operand.vmem [shape: f32[16,8], index: 11, kind: input, shape index: {}]
  %s12 = inlined_call_operand.vmem [shape: f32[8,2], index: 12, kind: input, shape index: {}]
  %s13 = inlined_call_operand.vmem [shape: f32[8,2], index: 13, kind: input, shape index: {}]
  %s14 = inlined_call_operand.vmem [shape: f32[1,8], index: 14, kind: input, shape index: {}]
  %s15 = inlined_call_operand.vmem [shape: f32[8,1], index: 15, kind: input, shape index: {}]
  %s16 = inlined_call_operand.vmem [shape: f32[16,1], index: 16, kind: output, shape index: {}]
  %s17 = sld [smem:[#allocation0]]
  $region74: #{nirm_forward.1} parent=0
    _
  %s19 = ssub.s32 1, %s17
  %s20 = scalar_select 0, %s19, %s17
  // Predicated region
  $region2: #{nirm_forward.1} parent=0 // pred_check
    _
  $region3: #{nirm_forward.1} parent=0 // pred_check_branch
    %22 = sbr.rel (0) target = $region5
  $region4: #{nirm_forward.1} parent=0 // pred_region
    _
  $region5: #{nirm_forward.1} parent=0 // pred_fallthru
    _
  // Predicated region
  $region6: #{nirm_forward.1} parent=0 // pred_check
    _
  $region7: #{nirm_forward.1} parent=0 // pred_check_branch
    %24 = sbr.rel (0) target = $region9
  $region8: #{nirm_forward.1} parent=0 // pred_region
    _
  $region9: #{nirm_forward.1} parent=0 // pred_fallthru
    _
  // Predicated region
  $region10: #{nirm_forward.1} parent=0 // pred_check
    _
  $region11: #{nirm_forward.1} parent=0 // pred_check_branch
    %26 = sbr.rel (0) target = $region13
  $region12: #{nirm_forward.1} parent=0 // pred_region
    _
  $region13: #{nirm_forward.1} parent=0 // pred_fallthru
    _
  // Predicated region
  $region14: #{nirm_forward.1} parent=0 // pred_check
    _
  $region15: #{nirm_forward.1} parent=0 // pred_check_branch
    %28 = sbr.rel (0) target = $region17
  $region16: #{nirm_forward.1} parent=0 // pred_region
    _
  $region17: #{nirm_forward.1} parent=0 // pred_fallthru
    _
  // Predicated region
  $region18: #{nirm_forward.1} parent=0 // pred_check
    _
  $region19: #{nirm_forward.1} parent=0 // pred_check_branch
    %30 = sbr.rel (0) target = $region21
  $region20: #{nirm_forward.1} parent=0 // pred_region
    _
  $region21: #{nirm_forward.1} parent=0 // pred_fallthru
    _
  // Predicated region
  $region22: #{nirm_forward.1} parent=0 // pred_check
    _
  $region23: #{nirm_forward.1} parent=0 // pred_check_branch
    %32 = sbr.rel (0) target = $region25
  $region24: #{nirm_forward.1} parent=0 // pred_region
    _
  $region25: #{nirm_forward.1} parent=0 // pred_fallthru
    _
  // Predicated region
  $region26: #{nirm_forward.1} parent=0 // pred_check
    _
  $region27: #{nirm_forward.1} parent=0 // pred_check_branch
    %34 = sbr.rel (0) target = $region29
  $region28: #{nirm_forward.1} parent=0 // pred_region
    _
  $region29: #{nirm_forward.1} parent=0 // pred_fallthru
    _
  // Predicated region
  $region30: #{nirm_forward.1} parent=0 // pred_check
    _
  $region31: #{nirm_forward.1} parent=0 // pred_check_branch
    %36 = sbr.rel (0) target = $region33
  $region32: #{nirm_forward.1} parent=0 // pred_region
    _
  $region33: #{nirm_forward.1} parent=0 // pred_fallthru
    _
  // Predicated region
  $region34: #{nirm_forward.1} parent=0 // pred_check
    _
  $region35: #{nirm_forward.1} parent=0 // pred_check_branch
    %38 = sbr.rel (0) target = $region37
  $region36: #{nirm_forward.1} parent=0 // pred_region
    _
  $region37: #{nirm_forward.1} parent=0 // pred_fallthru
    _
  // Predicated region
  $region38: #{nirm_forward.1} parent=0 // pred_check
    _
  $region39: #{nirm_forward.1} parent=0 // pred_check_branch
    %40 = sbr.rel (0) target = $region41
  $region40: #{nirm_forward.1} parent=0 // pred_region
    _
  $region41: #{nirm_forward.1} parent=0 // pred_fallthru
    _
  // Predicated region
  $region42: #{nirm_forward.1} parent=0 // pred_check
    _
  $region43: #{nirm_forward.1} parent=0 // pred_check_branch
    %42 = sbr.rel (0) target = $region45
  $region44: #{nirm_forward.1} parent=0 // pred_region
    _
  $region45: #{nirm_forward.1} parent=0 // pred_fallthru
    _
  // Predicated region
  $region46: #{nirm_forward.1} parent=0 // pred_check
    _
  $region47: #{nirm_forward.1} parent=0 // pred_check_branch
    %44 = sbr.rel (0) target = $region49
  $region48: #{nirm_forward.1} parent=0 // pred_region
    _
  $region49: #{nirm_forward.1} parent=0 // pred_fallthru
    _
  // Predicated region
  $region50: #{nirm_forward.1} parent=0 // pred_check
    _
  $region51: #{nirm_forward.1} parent=0 // pred_check_branch
    %46 = sbr.rel (0) target = $region53
  $region52: #{nirm_forward.1} parent=0 // pred_region
    _
  $region53: #{nirm_forward.1} parent=0 // pred_fallthru
    _
  // Predicated region
  $region54: #{nirm_forward.1} parent=0 // pred_check
    _
  $region55: #{nirm_forward.1} parent=0 // pred_check_branch
    %48 = sbr.rel (0) target = $region57
  $region56: #{nirm_forward.1} parent=0 // pred_region
    _
  $region57: #{nirm_forward.1} parent=0 // pred_fallthru
    _
  // Predicated region
  $region58: #{nirm_forward.1} parent=0 // pred_check
    _
  $region59: #{nirm_forward.1} parent=0 // pred_check_branch
    %50 = sbr.rel (0) target = $region61
  $region60: #{nirm_forward.1} parent=0 // pred_region
    _
  $region61: #{nirm_forward.1} parent=0 // pred_fallthru
    _
  // Predicated region
  $region62: #{nirm_forward.1} parent=0 // pred_check
    _
  $region63: #{nirm_forward.1} parent=0 // pred_check_branch
    %52 = sbr.rel (0) target = $region65
  $region64: #{nirm_forward.1} parent=0 // pred_region
    _
  $region65: #{nirm_forward.1} parent=0 // pred_fallthru
    _
  %v53 = vld [vmem:[%s0] sm:$0xff]
  %v54 = vld [vmem:[%s0 + $0x8] sm:$0xff]
  %v55 = vld [vmem:[%s1] sm:$0xff]
  %v56 = vld [vmem:[%s1 + $0x8] sm:$0xff]
  %57 = vxpose.xlu0.b32.start [1/16] %v55, 128
  %58 = vxpose.xlu0.b32.cont [2/16] %v56, 128
  %59 = vxpose.xlu0.b32.cont [3/16] 0.0, 128
  %60 = vxpose.xlu0.b32.cont [4/16] 0.0, 128
  %61 = vxpose.xlu0.b32.cont [5/16] 0.0, 128
  %62 = vxpose.xlu0.b32.cont [6/16] 0.0, 128
  %63 = vxpose.xlu0.b32.cont [7/16] 0.0, 128
  %64 = vxpose.xlu0.b32.cont [8/16] 0.0, 128
  %65 = vxpose.xlu0.b32.cont [9/16] 0.0, 128
  %66 = vxpose.xlu0.b32.cont [10/16] 0.0, 128
  %67 = vxpose.xlu0.b32.cont [11/16] 0.0, 128
  %68 = vxpose.xlu0.b32.cont [12/16] 0.0, 128
  %69 = vxpose.xlu0.b32.cont [13/16] 0.0, 128
  %70 = vxpose.xlu0.b32.cont [14/16] 0.0, 128
  %71 = vxpose.xlu0.b32.cont [15/16] 0.0, 128
  %72 = vxpose.xlu0.b32.end [16/16] 0.0, 128
  %v73 = vpop.trf.xlu0
  %v74 = vpop.trf.xlu0
  %v75 = vpop.trf.xlu0
  %v76 = vpop.trf.xlu0
  %v77 = vpop.trf.xlu0
  %v78 = vpop.trf.xlu0
  %v79 = vpop.trf.xlu0
  %v80 = vpop.trf.xlu0
  %v81 = vpop.trf.xlu0
  %v82 = vpop.trf.xlu0
  %v83 = vpop.trf.xlu0
  %v84 = vpop.trf.xlu0
  %v85 = vpop.trf.xlu0
  %v86 = vpop.trf.xlu0
  %v87 = vpop.trf.xlu0
  %v88 = vpop.trf.xlu0
  %vm89 = vcmp.gt.f32.partialorder %v73, 0.0
  %vm90 = vcmp.gt.f32.partialorder %v74, 0.0
  %v91 = vld [vmem:[%s2] sm:$0x1f]
  %v92 = vld [vmem:[%s3] sm:$0x1]
  %v94 = vperm.slane %v92, 0
  %vm96 = vcmask 39936
  %v98 = vsel %vm96, %v53, 0
  %v101 = vsel %vm96, %v54, 0
  %vm103 = vcmask 1044480
  %v105 = vsel %vm103, %v91, 0
  %107 = vmatpush.msra.mxu0 0.0
  %108 = vmatpush.msra.mxu0 0.0
  %109 = vmatpush.msra.mxu0 0.0
  %110 = vmatpush.msra.mxu0 0.0
  %111 = vmatpush.msra.mxu0 0.0
  %112 = vmatpush.msra.mxu0 0.0
  %113 = vmatpush.msra.mxu0 0.0
  %114 = vmatpush.msra.mxu0 0.0
  %115 = vmatpush.msra.mxu0 0.0
  %116 = vmatpush.msra.mxu0 0.0
  %117 = vmatpush.msra.mxu0 0.0
  %118 = vmatpush.msra.mxu0 0.0
  %119 = vmatpush.msra.mxu0 0.0
  %120 = vmatpush.msra.mxu0 0.0
  %121 = vmatpush.msra.mxu0 0.0
  %122 = vmatpush.msra.mxu0 %v105
  %123 = vmatmul.f32.gmra.mxu0 %v98
  %v124 = vpop.f32.mrf.mxu0
  %v125 = vadd.f32 %v94, %v124
  %126 = vmatmul.f32.gmra.mxu0 %v101
  %v127 = vpop.f32.mrf.mxu0
  %v128 = vadd.f32 %v94, %v127
  %129 = vdwg.mxu0
  %v130 = vld [vmem:[%s5] sm:$0xff]
  %v131 = vld [vmem:[%s5 + $0x8] sm:$0xff]
  %v132 = vld [vmem:[%s5 + $0x10] sm:$0xff]
  %v133 = vld [vmem:[%s5 + $0x18] sm:$0xff]
  %vm134 = vcmask 261120
  %v136 = vsel %vm134, %v125, 0
  %v139 = vsel %vm134, %v128, 0
  %141 = vmatpush.msra.mxu0 0.0
  %142 = vmatpush.msra.mxu0 0.0
  %143 = vmatpush.msra.mxu0 0.0
  %144 = vmatpush.msra.mxu0 0.0
  %145 = vmatpush.msra.mxu0 0.0
  %146 = vmatpush.msra.mxu0 0.0
  %147 = vmatpush.msra.mxu0 0.0
  %148 = vmatpush.msra.mxu0 0.0
  %149 = vmatpush.msra.mxu0 0.0
  %150 = vmatpush.msra.mxu0 0.0
  %151 = vmatpush.msra.mxu0 0.0
  %152 = vmatpush.msra.mxu0 0.0
  %153 = vmatpush.msra.mxu0 %v133
  %154 = vmatpush.msra.mxu0 %v132
  %155 = vmatpush.msra.mxu0 %v131
  %156 = vmatpush.msra.mxu0 %v130
  %157 = vmatmul.f32.gmra.mxu0 %v136
  %v158 = vpop.f32.mrf.mxu0
  %v159 = vadd.f32 0.0, %v158
  %160 = vmatmul.f32.gmra.mxu0 %v139
  %v161 = vpop.f32.mrf.mxu0
  %v162 = vadd.f32 0.0, %v161
  %163 = vdwg.mxu0
  %v164 = vld [vmem:[%s4] sm:$0xff]
  %v165 = vld [vmem:[%s4 + $0x8] sm:$0xff]
  %v166 = vld [vmem:[%s4 + $0x10] sm:$0xff]
  %v167 = vld [vmem:[%s4 + $0x18] sm:$0xff]
  %168 = vmatpush.msra.mxu0 0.0
  %169 = vmatpush.msra.mxu0 0.0
  %170 = vmatpush.msra.mxu0 0.0
  %171 = vmatpush.msra.mxu0 0.0
  %172 = vmatpush.msra.mxu0 0.0
  %173 = vmatpush.msra.mxu0 0.0
  %174 = vmatpush.msra.mxu0 0.0
  %175 = vmatpush.msra.mxu0 0.0
  %176 = vmatpush.msra.mxu0 0.0
  %177 = vmatpush.msra.mxu0 0.0
  %178 = vmatpush.msra.mxu0 0.0
  %179 = vmatpush.msra.mxu0 0.0
  %180 = vmatpush.msra.mxu0 %v167
  %181 = vmatpush.msra.mxu0 %v166
  %182 = vmatpush.msra.mxu0 %v165
  %183 = vmatpush.msra.mxu0 %v164
  %184 = vmatmul.f32.gmra.mxu0 %v136
  %v185 = vpop.f32.mrf.mxu0
  %v186 = vadd.f32 0.0, %v185
  %187 = vmatmul.f32.gmra.mxu0 %v139
  %v188 = vpop.f32.mrf.mxu0
  %v189 = vadd.f32 0.0, %v188
  %190 = vdwg.mxu0
  %191 = vxpose.xlu0.b32.start [1/16] %v186, 128
  %192 = vxpose.xlu0.b32.cont [2/16] %v189, 128
  %193 = vxpose.xlu0.b32.cont [3/16] 0.0, 128
  %194 = vxpose.xlu0.b32.cont [4/16] 0.0, 128
  %195 = vxpose.xlu0.b32.cont [5/16] 0.0, 128
  %196 = vxpose.xlu0.b32.cont [6/16] 0.0, 128
  %197 = vxpose.xlu0.b32.cont [7/16] 0.0, 128
  %198 = vxpose.xlu0.b32.cont [8/16] 0.0, 128
  %199 = vxpose.xlu0.b32.cont [9/16] 0.0, 128
  %200 = vxpose.xlu0.b32.cont [10/16] 0.0, 128
  %201 = vxpose.xlu0.b32.cont [11/16] 0.0, 128
  %202 = vxpose.xlu0.b32.cont [12/16] 0.0, 128
  %203 = vxpose.xlu0.b32.cont [13/16] 0.0, 128
  %204 = vxpose.xlu0.b32.cont [14/16] 0.0, 128
  %205 = vxpose.xlu0.b32.cont [15/16] 0.0, 128
  %206 = vxpose.xlu0.b32.end [16/16] 0.0, 128
  %v207 = vpop.trf.xlu0
  %v208 = vpop.trf.xlu0
  %v209 = vpop.trf.xlu0
  %v210 = vpop.trf.xlu0
  %v211 = vpop.trf.xlu0
  %v212 = vpop.trf.xlu0
  %v213 = vpop.trf.xlu0
  %v214 = vpop.trf.xlu0
  %v215 = vpop.trf.xlu0
  %v216 = vpop.trf.xlu0
  %v217 = vpop.trf.xlu0
  %v218 = vpop.trf.xlu0
  %v219 = vpop.trf.xlu0
  %v220 = vpop.trf.xlu0
  %v221 = vpop.trf.xlu0
  %v222 = vpop.trf.xlu0
  %v223 = vld [vmem:[%s6] sm:$0x1]
  %225 = vset.pattern.permute.xlu0 0
  %226 = vperm.xlu0 %225, %v159
  %v227 = vpop.permute.xlu0 %226
  %230 = vset.pattern.permute.xlu0 0
  %231 = vperm.xlu0 %230, %v162
  %v232 = vpop.permute.xlu0 %231
  %v234 = vperm.slane %v207, 0
  %v235 = vadd.f32 %v227, %v234
  %v236 = vadd.f32 %v232, %v234
  %vm237 = vcmp.gt.f32.partialorder %v235, 0.0
  %vm238 = vcmp.gt.f32.partialorder %v236, 0.0
  %v239 = vmul.f32 %v235, 0.2
  %v240 = vmul.f32 %v236, 0.2
  %v241 = vsel %vm237, %v235, %v239
  %v242 = vsel %vm238, %v236, %v240
  %v243 = vsel %vm89, %v241, -1e+30
  %v244 = vsel %vm90, %v242, -1e+30
  %vm245 = vcmask 130048
  %v246 = vsel %vm245, %v243, -inf
  %247 = vmax.xlane.f32.xlu0 %v246
  %v248 = vpop.xlane.xlu0 %247
  %v249 = vsel %vm245, %v244, -inf
  %250 = vmax.xlane.f32.xlu0 %v249
  %v251 = vpop.xlane.xlu0 %250
  %v252 = vsub.f32 %v243, %v248
  %v253 = vsub.f32 %v244, %v251
  %v254 = vmul.f32 %v252, 1.442695
  %v255 = vpow.pop %v254
  %v256 = vmul.f32 %v253, 1.442695
  %v257 = vpow.pop %v256
  %v258 = vsel %vm89, %v255, 0.0
  %v259 = vsel %vm90, %v257, 0.0
  %v260 = vsel %vm245, %v258, 0.0
  %261 = vadd.xlane.f32.xlu0 %v260
  %v262 = vpop.xlane.xlu0 %261
  %v263 = vsel %vm245, %v259, 0.0
  %264 = vadd.xlane.f32.xlu0 %v263
  %v265 = vpop.xlane.xlu0 %264
  %v266 = vrcp.pop %v262
  %v267 = vrcp.pop %v265
  %v268 = vmul.f32 %v258, %v266
  %v269 = vmul.f32 %v259, %v267
  %v271 = vperm.slane %v223, 0
  %v274 = vsel %vm245, %v268, 0
  %v277 = vsel %vm245, %v269, 0
  %279 = vmatpush.msra.mxu0 0.0
  %280 = vmatpush.msra.mxu0 0.0
  %281 = vmatpush.msra.mxu0 0.0
  %282 = vmatpush.msra.mxu0 0.0
  %283 = vmatpush.msra.mxu0 0.0
  %284 = vmatpush.msra.mxu0 0.0
  %285 = vmatpush.msra.mxu0 0.0
  %286 = vmatpush.msra.mxu0 0.0
  %287 = vmatpush.msra.mxu0 0.0
  %288 = vmatpush.msra.mxu0 0.0
  %289 = vmatpush.msra.mxu0 0.0
  %290 = vmatpush.msra.mxu0 0.0
  %291 = vmatpush.msra.mxu0 0.0
  %292 = vmatpush.msra.mxu0 0.0
  %293 = vmatpush.msra.mxu0 %v128
  %294 = vmatpush.msra.mxu0 %v125
  %295 = vmatmul.f32.gmra.mxu0 %v274
  %v296 = vpop.f32.mrf.mxu0
  %v297 = vadd.f32 %v271, %v296
  %298 = vmatmul.f32.gmra.mxu0 %v277
  %v299 = vpop.f32.mrf.mxu0
  %v300 = vadd.f32 %v271, %v299
  %301 = vdwg.mxu0
  %vm302 = vcmask 31744
  %303 = vst.msk [vmem:[#allocation2] sm:$0xff] %vm302, %v297
  %304 = vst.msk [vmem:[#allocation2 + $0x8] sm:$0xff] %vm302, %v300
  %305 = vset.pattern.permute.xlu0 1
  %306 = vperm.xlu0 %305, %v159
  %v307 = vpop.permute.xlu0 %306
  %309 = vset.pattern.permute.xlu0 1
  %310 = vperm.xlu0 %309, %v162
  %v311 = vpop.permute.xlu0 %310
  %v313 = vperm.slane %v207, 1
  %v314 = vadd.f32 %v307, %v313
  %v315 = vadd.f32 %v311, %v313
  %vm316 = vcmp.gt.f32.partialorder %v314, 0.0
  %vm317 = vcmp.gt.f32.partialorder %v315, 0.0
  %v318 = vmul.f32 %v314, 0.2
  %v319 = vmul.f32 %v315, 0.2
  %v320 = vsel %vm316, %v314, %v318
  %v321 = vsel %vm317, %v315, %v319
  %v322 = vsel %vm89, %v320, -1e+30
  %v323 = vsel %vm90, %v321, -1e+30
  %v324 = vsel %vm245, %v322, -inf
  %325 = vmax.xlane.f32.xlu0 %v324
  %v326 = vpop.xlane.xlu0 %325
  %v327 = vsel %vm245, %v323, -inf
  %328 = vmax.xlane.f32.xlu0 %v327
  %v329 = vpop.xlane.xlu0 %328
  %v330 = vsub.f32 %v322, %v326
  %v331 = vsub.f32 %v323, %v329
  %v332 = vmul.f32 %v330, 1.442695
  %v333 = vpow.pop %v332
  %v334 = vmul.f32 %v331, 1.442695
  %v335 = vpow.pop %v334
  %v336 = vsel %vm89, %v333, 0.0
  %v337 = vsel %vm90, %v335, 0.0
  %v338 = vsel %vm245, %v336, 0.0
  %339 = vadd.xlane.f32.xlu0 %v338
  %v340 = vpop.xlane.xlu0 %339
  %v341 = vsel %vm245, %v337, 0.0
  %342 = vadd.xlane.f32.xlu0 %v341
  %v343 = vpop.xlane.xlu0 %342
  %v344 = vrcp.pop %v340
  %v345 = vrcp.pop %v343
  %v346 = vmul.f32 %v336, %v344
  %v347 = vmul.f32 %v337, %v345
  %348 = vrot.lane.b32.xlu0 %v125, 124
  %v349 = vpop.permute.xlu0 %348
  %350 = vrot.lane.b32.xlu0 %v128, 124
  %v351 = vpop.permute.xlu0 %350
  %354 = vrot.lane.b32.xlu0 %v271, 124
  %v355 = vpop.permute.xlu0 %354
  %v358 = vsel %vm245, %v346, 0
  %v361 = vsel %vm245, %v347, 0
  %363 = vmatpush.msra.mxu0 0.0
  %364 = vmatpush.msra.mxu0 0.0
  %365 = vmatpush.msra.mxu0 0.0
  %366 = vmatpush.msra.mxu0 0.0
  %367 = vmatpush.msra.mxu0 0.0
  %368 = vmatpush.msra.mxu0 0.0
  %369 = vmatpush.msra.mxu0 0.0
  %370 = vmatpush.msra.mxu0 0.0
  %371 = vmatpush.msra.mxu0 0.0
  %372 = vmatpush.msra.mxu0 0.0
  %373 = vmatpush.msra.mxu0 0.0
  %374 = vmatpush.msra.mxu0 0.0
  %375 = vmatpush.msra.mxu0 0.0
  %376 = vmatpush.msra.mxu0 0.0
  %377 = vmatpush.msra.mxu0 %v351
  %378 = vmatpush.msra.mxu0 %v349
  %379 = vmatmul.f32.gmra.mxu0 %v358
  %v380 = vpop.f32.mrf.mxu0
  %v381 = vadd.f32 %v355, %v380
  %382 = vmatmul.f32.gmra.mxu0 %v361
  %v383 = vpop.f32.mrf.mxu0
  %v384 = vadd.f32 %v355, %v383
  %385 = vdwg.mxu0
  %388 = vrot.lane.b32.xlu0 %v381, 4
  %v389 = vpop.permute.xlu0 %388
  %390 = vrot.lane.b32.xlu0 %v384, 4
  %v391 = vpop.permute.xlu0 %390
  %vm394 = vcmask 64544
  %395 = vst.msk [vmem:[#allocation2] sm:$0xff] %vm394, %v389
  %396 = vst.msk [vmem:[#allocation2 + $0x8] sm:$0xff] %vm394, %v391
  %397 = vset.pattern.permute.xlu0 2
  %398 = vperm.xlu0 %397, %v159
  %v399 = vpop.permute.xlu0 %398
  %401 = vset.pattern.permute.xlu0 2
  %402 = vperm.xlu0 %401, %v162
  %v403 = vpop.permute.xlu0 %402
  %v405 = vperm.slane %v207, 2
  %v406 = vadd.f32 %v399, %v405
  %v407 = vadd.f32 %v403, %v405
  %vm408 = vcmp.gt.f32.partialorder %v406, 0.0
  %vm409 = vcmp.gt.f32.partialorder %v407, 0.0
  %v410 = vmul.f32 %v406, 0.2
  %v411 = vmul.f32 %v407, 0.2
  %v412 = vsel %vm408, %v406, %v410
  %v413 = vsel %vm409, %v407, %v411
  %v414 = vsel %vm89, %v412, -1e+30
  %v415 = vsel %vm90, %v413, -1e+30
  %v416 = vsel %vm245, %v414, -inf
  %417 = vmax.xlane.f32.xlu0 %v416
  %v418 = vpop.xlane.xlu0 %417
  %v419 = vsel %vm245, %v415, -inf
  %420 = vmax.xlane.f32.xlu0 %v419
  %v421 = vpop.xlane.xlu0 %420
  %v422 = vsub.f32 %v414, %v418
  %v423 = vsub.f32 %v415, %v421
  %v424 = vmul.f32 %v422, 1.442695
  %v425 = vpow.pop %v424
  %v426 = vmul.f32 %v423, 1.442695
  %v427 = vpow.pop %v426
  %v428 = vsel %vm89, %v425, 0.0
  %v429 = vsel %vm90, %v427, 0.0
  %v430 = vsel %vm245, %v428, 0.0
  %431 = vadd.xlane.f32.xlu0 %v430
  %v432 = vpop.xlane.xlu0 %431
  %v433 = vsel %vm245, %v429, 0.0
  %434 = vadd.xlane.f32.xlu0 %v433
  %v435 = vpop.xlane.xlu0 %434
  %v436 = vrcp.pop %v432
  %v437 = vrcp.pop %v435
  %v438 = vmul.f32 %v428, %v436
  %v439 = vmul.f32 %v429, %v437
  %440 = vrot.lane.b32.xlu0 %v125, 120
  %v441 = vpop.permute.xlu0 %440
  %442 = vrot.lane.b32.xlu0 %v128, 120
  %v443 = vpop.permute.xlu0 %442
  %446 = vrot.lane.b32.xlu0 %v271, 120
  %v447 = vpop.permute.xlu0 %446
  %v450 = vsel %vm245, %v438, 0
  %v453 = vsel %vm245, %v439, 0
  %455 = vmatpush.msra.mxu0 0.0
  %456 = vmatpush.msra.mxu0 0.0
  %457 = vmatpush.msra.mxu0 0.0
  %458 = vmatpush.msra.mxu0 0.0
  %459 = vmatpush.msra.mxu0 0.0
  %460 = vmatpush.msra.mxu0 0.0
  %461 = vmatpush.msra.mxu0 0.0
  %462 = vmatpush.msra.mxu0 0.0
  %463 = vmatpush.msra.mxu0 0.0
  %464 = vmatpush.msra.mxu0 0.0
  %465 = vmatpush.msra.mxu0 0.0
  %466 = vmatpush.msra.mxu0 0.0
  %467 = vmatpush.msra.mxu0 0.0
  %468 = vmatpush.msra.mxu0 0.0
  %469 = vmatpush.msra.mxu0 %v443
  %470 = vmatpush.msra.mxu0 %v441
  %471 = vmatmul.f32.gmra.mxu0 %v450
  %v472 = vpop.f32.mrf.mxu0
  %v473 = vadd.f32 %v447, %v472
  %474 = vmatmul.f32.gmra.mxu0 %v453
  %v475 = vpop.f32.mrf.mxu0
  %v476 = vadd.f32 %v447, %v475
  %477 = vdwg.mxu0
  %480 = vrot.lane.b32.xlu0 %v473, 8
  %v481 = vpop.permute.xlu0 %480
  %482 = vrot.lane.b32.xlu0 %v476, 8
  %v483 = vpop.permute.xlu0 %482
  %vm486 = vcmask 97344
  %487 = vst.msk [vmem:[#allocation2] sm:$0xff] %vm486, %v481
  %488 = vst.msk [vmem:[#allocation2 + $0x8] sm:$0xff] %vm486, %v483
  %489 = vset.pattern.permute.xlu0 3
  %490 = vperm.xlu0 %489, %v159
  %v491 = vpop.permute.xlu0 %490
  %493 = vset.pattern.permute.xlu0 3
  %494 = vperm.xlu0 %493, %v162
  %v495 = vpop.permute.xlu0 %494
  %v497 = vperm.slane %v207, 3
  %v498 = vadd.f32 %v491, %v497
  %v499 = vadd.f32 %v495, %v497
  %vm500 = vcmp.gt.f32.partialorder %v498, 0.0
  %vm501 = vcmp.gt.f32.partialorder %v499, 0.0
  %v502 = vmul.f32 %v498, 0.2
  %v503 = vmul.f32 %v499, 0.2
  %v504 = vsel %vm500, %v498, %v502
  %v505 = vsel %vm501, %v499, %v503
  %v506 = vsel %vm89, %v504, -1e+30
  %v507 = vsel %vm90, %v505, -1e+30
  %v508 = vsel %vm245, %v506, -inf
  %509 = vmax.xlane.f32.xlu0 %v508
  %v510 = vpop.xlane.xlu0 %509
  %v511 = vsel %vm245, %v507, -inf
  %512 = vmax.xlane.f32.xlu0 %v511
  %v513 = vpop.xlane.xlu0 %512
  %v514 = vsub.f32 %v506, %v510
  %v515 = vsub.f32 %v507, %v513
  %v516 = vmul.f32 %v514, 1.442695
  %v517 = vpow.pop %v516
  %v518 = vmul.f32 %v515, 1.442695
  %v519 = vpow.pop %v518
  %v520 = vsel %vm89, %v517, 0.0
  %v521 = vsel %vm90, %v519, 0.0
  %v522 = vsel %vm245, %v520, 0.0
  %523 = vadd.xlane.f32.xlu0 %v522
  %v524 = vpop.xlane.xlu0 %523
  %v525 = vsel %vm245, %v521, 0.0
  %526 = vadd.xlane.f32.xlu0 %v525
  %v527 = vpop.xlane.xlu0 %526
  %v528 = vrcp.pop %v524
  %v529 = vrcp.pop %v527
  %v530 = vmul.f32 %v520, %v528
  %v531 = vmul.f32 %v521, %v529
  %532 = vrot.lane.b32.xlu0 %v125, 116
  %v533 = vpop.permute.xlu0 %532
  %534 = vrot.lane.b32.xlu0 %v128, 116
  %v535 = vpop.permute.xlu0 %534
  %538 = vrot.lane.b32.xlu0 %v271, 116
  %v539 = vpop.permute.xlu0 %538
  %v542 = vsel %vm245, %v530, 0
  %v545 = vsel %vm245, %v531, 0
  %547 = vmatpush.msra.mxu0 0.0
  %548 = vmatpush.msra.mxu0 0.0
  %549 = vmatpush.msra.mxu0 0.0
  %550 = vmatpush.msra.mxu0 0.0
  %551 = vmatpush.msra.mxu0 0.0
  %552 = vmatpush.msra.mxu0 0.0
  %553 = vmatpush.msra.mxu0 0.0
  %554 = vmatpush.msra.mxu0 0.0
  %555 = vmatpush.msra.mxu0 0.0
  %556 = vmatpush.msra.mxu0 0.0
  %557 = vmatpush.msra.mxu0 0.0
  %558 = vmatpush.msra.mxu0 0.0
  %559 = vmatpush.msra.mxu0 0.0
  %560 = vmatpush.msra.mxu0 0.0
  %561 = vmatpush.msra.mxu0 %v535
  %562 = vmatpush.msra.mxu0 %v533
  %563 = vmatmul.f32.gmra.mxu0 %v542
  %v564 = vpop.f32.mrf.mxu0
  %v565 = vadd.f32 %v539, %v564
  %566 = vmatmul.f32.gmra.mxu0 %v545
  %v567 = vpop.f32.mrf.mxu0
  %v568 = vadd.f32 %v539, %v567
  %569 = vdwg.mxu0
  %572 = vrot.lane.b32.xlu0 %v565, 12
  %v573 = vpop.permute.xlu0 %572
  %574 = vrot.lane.b32.xlu0 %v568, 12
  %v575 = vpop.permute.xlu0 %574
  %vm578 = vcmask 130144
  %579 = vst.msk [vmem:[#allocation2] sm:$0xff] %vm578, %v573
  %580 = vst.msk [vmem:[#allocation2 + $0x8] sm:$0xff] %vm578, %v575
  %581 = vset.pattern.permute.xlu0 4
  %582 = vperm.xlu0 %581, %v159
  %v583 = vpop.permute.xlu0 %582
  %585 = vset.pattern.permute.xlu0 4
  %586 = vperm.xlu0 %585, %v162
  %v587 = vpop.permute.xlu0 %586
  %v589 = vperm.slane %v207, 4
  %v590 = vadd.f32 %v583, %v589
  %v591 = vadd.f32 %v587, %v589
  %vm592 = vcmp.gt.f32.partialorder %v590, 0.0
  %vm593 = vcmp.gt.f32.partialorder %v591, 0.0
  %v594 = vmul.f32 %v590, 0.2
  %v595 = vmul.f32 %v591, 0.2
  %v596 = vsel %vm592, %v590, %v594
  %v597 = vsel %vm593, %v591, %v595
  %v598 = vsel %vm89, %v596, -1e+30
  %v599 = vsel %vm90, %v597, -1e+30
  %v600 = vsel %vm245, %v598, -inf
  %601 = vmax.xlane.f32.xlu0 %v600
  %v602 = vpop.xlane.xlu0 %601
  %v603 = vsel %vm245, %v599, -inf
  %604 = vmax.xlane.f32.xlu0 %v603
  %v605 = vpop.xlane.xlu0 %604
  %v606 = vsub.f32 %v598, %v602
  %v607 = vsub.f32 %v599, %v605
  %v608 = vmul.f32 %v606, 1.442695
  %v609 = vpow.pop %v608
  %v610 = vmul.f32 %v607, 1.442695
  %v611 = vpow.pop %v610
  %v612 = vsel %vm89, %v609, 0.0
  %v613 = vsel %vm90, %v611, 0.0
  %v614 = vsel %vm245, %v612, 0.0
  %615 = vadd.xlane.f32.xlu0 %v614
  %v616 = vpop.xlane.xlu0 %615
  %v617 = vsel %vm245, %v613, 0.0
  %618 = vadd.xlane.f32.xlu0 %v617
  %v619 = vpop.xlane.xlu0 %618
  %v620 = vrcp.pop %v616
  %v621 = vrcp.pop %v619
  %v622 = vmul.f32 %v612, %v620
  %v623 = vmul.f32 %v613, %v621
  %624 = vrot.lane.b32.xlu0 %v125, 112
  %v625 = vpop.permute.xlu0 %624
  %626 = vrot.lane.b32.xlu0 %v128, 112
  %v627 = vpop.permute.xlu0 %626
  %630 = vrot.lane.b32.xlu0 %v271, 112
  %v631 = vpop.permute.xlu0 %630
  %v634 = vsel %vm245, %v622, 0
  %v637 = vsel %vm245, %v623, 0
  %639 = vmatpush.msra.mxu0 0.0
  %640 = vmatpush.msra.mxu0 0.0
  %641 = vmatpush.msra.mxu0 0.0
  %642 = vmatpush.msra.mxu0 0.0
  %643 = vmatpush.msra.mxu0 0.0
  %644 = vmatpush.msra.mxu0 0.0
  %645 = vmatpush.msra.mxu0 0.0
  %646 = vmatpush.msra.mxu0 0.0
  %647 = vmatpush.msra.mxu0 0.0
  %648 = vmatpush.msra.mxu0 0.0
  %649 = vmatpush.msra.mxu0 0.0
  %650 = vmatpush.msra.mxu0 0.0
  %651 = vmatpush.msra.mxu0 0.0
  %652 = vmatpush.msra.mxu0 0.0
  %653 = vmatpush.msra.mxu0 %v627
  %654 = vmatpush.msra.mxu0 %v625
  %655 = vmatmul.f32.gmra.mxu0 %v634
  %v656 = vpop.f32.mrf.mxu0
  %v657 = vadd.f32 %v631, %v656
  %658 = vmatmul.f32.gmra.mxu0 %v637
  %v659 = vpop.f32.mrf.mxu0
  %v660 = vadd.f32 %v631, %v659
  %661 = vdwg.mxu0
  %664 = vrot.lane.b32.xlu0 %v657, 16
  %v665 = vpop.permute.xlu0 %664
  %666 = vrot.lane.b32.xlu0 %v660, 16
  %v667 = vpop.permute.xlu0 %666
  %vm670 = vcmask 162944
  %671 = vst.msk [vmem:[#allocation2] sm:$0xff] %vm670, %v665
  %672 = vst.msk [vmem:[#allocation2 + $0x8] sm:$0xff] %vm670, %v667
  %673 = vset.pattern.permute.xlu0 5
  %674 = vperm.xlu0 %673, %v159
  %v675 = vpop.permute.xlu0 %674
  %677 = vset.pattern.permute.xlu0 5
  %678 = vperm.xlu0 %677, %v162
  %v679 = vpop.permute.xlu0 %678
  %v681 = vperm.slane %v207, 5
  %v682 = vadd.f32 %v675, %v681
  %v683 = vadd.f32 %v679, %v681
  %vm684 = vcmp.gt.f32.partialorder %v682, 0.0
  %vm685 = vcmp.gt.f32.partialorder %v683, 0.0
  %v686 = vmul.f32 %v682, 0.2
  %v687 = vmul.f32 %v683, 0.2
  %v688 = vsel %vm684, %v682, %v686
  %v689 = vsel %vm685, %v683, %v687
  %v690 = vsel %vm89, %v688, -1e+30
  %v691 = vsel %vm90, %v689, -1e+30
  %v692 = vsel %vm245, %v690, -inf
  %693 = vmax.xlane.f32.xlu0 %v692
  %v694 = vpop.xlane.xlu0 %693
  %v695 = vsel %vm245, %v691, -inf
  %696 = vmax.xlane.f32.xlu0 %v695
  %v697 = vpop.xlane.xlu0 %696
  %v698 = vsub.f32 %v690, %v694
  %v699 = vsub.f32 %v691, %v697
  %v700 = vmul.f32 %v698, 1.442695
  %v701 = vpow.pop %v700
  %v702 = vmul.f32 %v699, 1.442695
  %v703 = vpow.pop %v702
  %v704 = vsel %vm89, %v701, 0.0
  %v705 = vsel %vm90, %v703, 0.0
  %v706 = vsel %vm245, %v704, 0.0
  %707 = vadd.xlane.f32.xlu0 %v706
  %v708 = vpop.xlane.xlu0 %707
  %v709 = vsel %vm245, %v705, 0.0
  %710 = vadd.xlane.f32.xlu0 %v709
  %v711 = vpop.xlane.xlu0 %710
  %v712 = vrcp.pop %v708
  %v713 = vrcp.pop %v711
  %v714 = vmul.f32 %v704, %v712
  %v715 = vmul.f32 %v705, %v713
  %716 = vrot.lane.b32.xlu0 %v125, 108
  %v717 = vpop.permute.xlu0 %716
  %718 = vrot.lane.b32.xlu0 %v128, 108
  %v719 = vpop.permute.xlu0 %718
  %722 = vrot.lane.b32.xlu0 %v271, 108
  %v723 = vpop.permute.xlu0 %722
  %v726 = vsel %vm245, %v714, 0
  %v729 = vsel %vm245, %v715, 0
  %731 = vmatpush.msra.mxu0 0.0
  %732 = vmatpush.msra.mxu0 0.0
  %733 = vmatpush.msra.mxu0 0.0
  %734 = vmatpush.msra.mxu0 0.0
  %735 = vmatpush.msra.mxu0 0.0
  %736 = vmatpush.msra.mxu0 0.0
  %737 = vmatpush.msra.mxu0 0.0
  %738 = vmatpush.msra.mxu0 0.0
  %739 = vmatpush.msra.mxu0 0.0
  %740 = vmatpush.msra.mxu0 0.0
  %741 = vmatpush.msra.mxu0 0.0
  %742 = vmatpush.msra.mxu0 0.0
  %743 = vmatpush.msra.mxu0 0.0
  %744 = vmatpush.msra.mxu0 0.0
  %745 = vmatpush.msra.mxu0 %v719
  %746 = vmatpush.msra.mxu0 %v717
  %747 = vmatmul.f32.gmra.mxu0 %v726
  %v748 = vpop.f32.mrf.mxu0
  %v749 = vadd.f32 %v723, %v748
  %750 = vmatmul.f32.gmra.mxu0 %v729
  %v751 = vpop.f32.mrf.mxu0
  %v752 = vadd.f32 %v723, %v751
  %753 = vdwg.mxu0
  %756 = vrot.lane.b32.xlu0 %v749, 20
  %v757 = vpop.permute.xlu0 %756
  %758 = vrot.lane.b32.xlu0 %v752, 20
  %v759 = vpop.permute.xlu0 %758
  %vm762 = vcmask 195744
  %763 = vst.msk [vmem:[#allocation2] sm:$0xff] %vm762, %v757
  %764 = vst.msk [vmem:[#allocation2 + $0x8] sm:$0xff] %vm762, %v759
  %765 = vset.pattern.permute.xlu0 6
  %766 = vperm.xlu0 %765, %v159
  %v767 = vpop.permute.xlu0 %766
  %769 = vset.pattern.permute.xlu0 6
  %770 = vperm.xlu0 %769, %v162
  %v771 = vpop.permute.xlu0 %770
  %v773 = vperm.slane %v207, 6
  %v774 = vadd.f32 %v767, %v773
  %v775 = vadd.f32 %v771, %v773
  %vm776 = vcmp.gt.f32.partialorder %v774, 0.0
  %vm777 = vcmp.gt.f32.partialorder %v775, 0.0
  %v778 = vmul.f32 %v774, 0.2
  %v779 = vmul.f32 %v775, 0.2
  %v780 = vsel %vm776, %v774, %v778
  %v781 = vsel %vm777, %v775, %v779
  %v782 = vsel %vm89, %v780, -1e+30
  %v783 = vsel %vm90, %v781, -1e+30
  %v784 = vsel %vm245, %v782, -inf
  %785 = vmax.xlane.f32.xlu0 %v784
  %v786 = vpop.xlane.xlu0 %785
  %v787 = vsel %vm245, %v783, -inf
  %788 = vmax.xlane.f32.xlu0 %v787
  %v789 = vpop.xlane.xlu0 %788
  %v790 = vsub.f32 %v782, %v786
  %v791 = vsub.f32 %v783, %v789
  %v792 = vmul.f32 %v790, 1.442695
  %v793 = vpow.pop %v792
  %v794 = vmul.f32 %v791, 1.442695
  %v795 = vpow.pop %v794
  %v796 = vsel %vm89, %v793, 0.0
  %v797 = vsel %vm90, %v795, 0.0
  %v798 = vsel %vm245, %v796, 0.0
  %799 = vadd.xlane.f32.xlu0 %v798
  %v800 = vpop.xlane.xlu0 %799
  %v801 = vsel %vm245, %v797, 0.0
  %802 = vadd.xlane.f32.xlu0 %v801
  %v803 = vpop.xlane.xlu0 %802
  %v804 = vrcp.pop %v800
  %v805 = vrcp.pop %v803
  %v806 = vmul.f32 %v796, %v804
  %v807 = vmul.f32 %v797, %v805
  %808 = vrot.lane.b32.xlu0 %v125, 104
  %v809 = vpop.permute.xlu0 %808
  %810 = vrot.lane.b32.xlu0 %v128, 104
  %v811 = vpop.permute.xlu0 %810
  %814 = vrot.lane.b32.xlu0 %v271, 104
  %v815 = vpop.permute.xlu0 %814
  %v818 = vsel %vm245, %v806, 0
  %v821 = vsel %vm245, %v807, 0
  %823 = vmatpush.msra.mxu0 0.0
  %824 = vmatpush.msra.mxu0 0.0
  %825 = vmatpush.msra.mxu0 0.0
  %826 = vmatpush.msra.mxu0 0.0
  %827 = vmatpush.msra.mxu0 0.0
  %828 = vmatpush.msra.mxu0 0.0
  %829 = vmatpush.msra.mxu0 0.0
  %830 = vmatpush.msra.mxu0 0.0
  %831 = vmatpush.msra.mxu0 0.0
  %832 = vmatpush.msra.mxu0 0.0
  %833 = vmatpush.msra.mxu0 0.0
  %834 = vmatpush.msra.mxu0 0.0
  %835 = vmatpush.msra.mxu0 0.0
  %836 = vmatpush.msra.mxu0 0.0
  %837 = vmatpush.msra.mxu0 %v811
  %838 = vmatpush.msra.mxu0 %v809
  %839 = vmatmul.f32.gmra.mxu0 %v818
  %v840 = vpop.f32.mrf.mxu0
  %v841 = vadd.f32 %v815, %v840
  %842 = vmatmul.f32.gmra.mxu0 %v821
  %v843 = vpop.f32.mrf.mxu0
  %v844 = vadd.f32 %v815, %v843
  %845 = vdwg.mxu0
  %848 = vrot.lane.b32.xlu0 %v841, 24
  %v849 = vpop.permute.xlu0 %848
  %850 = vrot.lane.b32.xlu0 %v844, 24
  %v851 = vpop.permute.xlu0 %850
  %vm854 = vcmask 228544
  %855 = vst.msk [vmem:[#allocation2] sm:$0xff] %vm854, %v849
  %856 = vst.msk [vmem:[#allocation2 + $0x8] sm:$0xff] %vm854, %v851
  %857 = vset.pattern.permute.xlu0 7
  %858 = vperm.xlu0 %857, %v159
  %v859 = vpop.permute.xlu0 %858
  %861 = vset.pattern.permute.xlu0 7
  %862 = vperm.xlu0 %861, %v162
  %v863 = vpop.permute.xlu0 %862
  %v865 = vperm.slane %v207, 7
  %v866 = vadd.f32 %v859, %v865
  %v867 = vadd.f32 %v863, %v865
  %vm868 = vcmp.gt.f32.partialorder %v866, 0.0
  %vm869 = vcmp.gt.f32.partialorder %v867, 0.0
  %v870 = vmul.f32 %v866, 0.2
  %v871 = vmul.f32 %v867, 0.2
  %v872 = vsel %vm868, %v866, %v870
  %v873 = vsel %vm869, %v867, %v871
  %v874 = vsel %vm89, %v872, -1e+30
  %v875 = vsel %vm90, %v873, -1e+30
  %v876 = vsel %vm245, %v874, -inf
  %877 = vmax.xlane.f32.xlu0 %v876
  %v878 = vpop.xlane.xlu0 %877
  %v879 = vsel %vm245, %v875, -inf
  %880 = vmax.xlane.f32.xlu0 %v879
  %v881 = vpop.xlane.xlu0 %880
  %v882 = vsub.f32 %v874, %v878
  %v883 = vsub.f32 %v875, %v881
  %v884 = vmul.f32 %v882, 1.442695
  %v885 = vpow.pop %v884
  %v886 = vmul.f32 %v883, 1.442695
  %v887 = vpow.pop %v886
  %v888 = vsel %vm89, %v885, 0.0
  %v889 = vsel %vm90, %v887, 0.0
  %v890 = vsel %vm245, %v888, 0.0
  %891 = vadd.xlane.f32.xlu0 %v890
  %v892 = vpop.xlane.xlu0 %891
  %v893 = vsel %vm245, %v889, 0.0
  %894 = vadd.xlane.f32.xlu0 %v893
  %v895 = vpop.xlane.xlu0 %894
  %v896 = vrcp.pop %v892
  %v897 = vrcp.pop %v895
  %v898 = vmul.f32 %v888, %v896
  %v899 = vmul.f32 %v889, %v897
  %900 = vrot.lane.b32.xlu0 %v125, 100
  %v901 = vpop.permute.xlu0 %900
  %902 = vrot.lane.b32.xlu0 %v128, 100
  %v903 = vpop.permute.xlu0 %902
  %906 = vrot.lane.b32.xlu0 %v271, 100
  %v907 = vpop.permute.xlu0 %906
  %v910 = vsel %vm245, %v898, 0
  %v913 = vsel %vm245, %v899, 0
  %915 = vmatpush.msra.mxu0 0.0
  %916 = vmatpush.msra.mxu0 0.0
  %917 = vmatpush.msra.mxu0 0.0
  %918 = vmatpush.msra.mxu0 0.0
  %919 = vmatpush.msra.mxu0 0.0
  %920 = vmatpush.msra.mxu0 0.0
  %921 = vmatpush.msra.mxu0 0.0
  %922 = vmatpush.msra.mxu0 0.0
  %923 = vmatpush.msra.mxu0 0.0
  %924 = vmatpush.msra.mxu0 0.0
  %925 = vmatpush.msra.mxu0 0.0
  %926 = vmatpush.msra.mxu0 0.0
  %927 = vmatpush.msra.mxu0 0.0
  %928 = vmatpush.msra.mxu0 0.0
  %929 = vmatpush.msra.mxu0 %v903
  %930 = vmatpush.msra.mxu0 %v901
  %931 = vmatmul.f32.gmra.mxu0 %v910
  %v932 = vpop.f32.mrf.mxu0
  %v933 = vadd.f32 %v907, %v932
  %934 = vmatmul.f32.gmra.mxu0 %v913
  %v935 = vpop.f32.mrf.mxu0
  %v936 = vadd.f32 %v907, %v935
  %937 = vdwg.mxu0
  %940 = vrot.lane.b32.xlu0 %v933, 28
  %v941 = vpop.permute.xlu0 %940
  %942 = vrot.lane.b32.xlu0 %v936, 28
  %v943 = vpop.permute.xlu0 %942
  %vm946 = vcmask 261344
  %947 = vst.msk [vmem:[#allocation2] sm:$0xff] %vm946, %v941
  %948 = vst.msk [vmem:[#allocation2 + $0x8] sm:$0xff] %vm946, %v943
  %v949 = vld [vmem:[#allocation2] sm:$0xff]
  %v950 = vld [vmem:[#allocation2 + $0x8] sm:$0xff]
  %v951 = vld [vmem:[%s7] sm:$0xff]
  %v952 = vld [vmem:[%s7 + $0x8] sm:$0xff]
  %v953 = vld [vmem:[%s7 + $0x10] sm:$0xff]
  %v954 = vld [vmem:[%s7 + $0x18] sm:$0xff]
  %v956 = vsel %vm134, %v949, 0
  %v959 = vsel %vm134, %v950, 0
  %961 = vmatpush.msra.mxu0 0.0
  %962 = vmatpush.msra.mxu0 0.0
  %963 = vmatpush.msra.mxu0 0.0
  %964 = vmatpush.msra.mxu0 0.0
  %965 = vmatpush.msra.mxu0 0.0
  %966 = vmatpush.msra.mxu0 0.0
  %967 = vmatpush.msra.mxu0 0.0
  %968 = vmatpush.msra.mxu0 0.0
  %969 = vmatpush.msra.mxu0 0.0
  %970 = vmatpush.msra.mxu0 0.0
  %971 = vmatpush.msra.mxu0 0.0
  %972 = vmatpush.msra.mxu0 0.0
  %973 = vmatpush.msra.mxu0 %v954
  %974 = vmatpush.msra.mxu0 %v953
  %975 = vmatpush.msra.mxu0 %v952
  %976 = vmatpush.msra.mxu0 %v951
  %977 = vmatmul.f32.gmra.mxu0 %v956
  %v978 = vpop.f32.mrf.mxu0
  %v979 = vadd.f32 0.0, %v978
  %980 = vmatmul.f32.gmra.mxu0 %v959
  %v981 = vpop.f32.mrf.mxu0
  %v982 = vadd.f32 0.0, %v981
  %983 = vdwg.mxu0
  %v984 = vld [vmem:[%s9] sm:$0xff]
  %v985 = vld [vmem:[%s9 + $0x8] sm:$0xff]
  %v987 = vsel %vm245, %v979, 0
  %v990 = vsel %vm245, %v982, 0
  %992 = vmatpush.msra.mxu0 0.0
  %993 = vmatpush.msra.mxu0 0.0
  %994 = vmatpush.msra.mxu0 0.0
  %995 = vmatpush.msra.mxu0 0.0
  %996 = vmatpush.msra.mxu0 0.0
  %997 = vmatpush.msra.mxu0 0.0
  %998 = vmatpush.msra.mxu0 0.0
  %999 = vmatpush.msra.mxu0 0.0
  %1000 = vmatpush.msra.mxu0 0.0
  %1001 = vmatpush.msra.mxu0 0.0
  %1002 = vmatpush.msra.mxu0 0.0
  %1003 = vmatpush.msra.mxu0 0.0
  %1004 = vmatpush.msra.mxu0 0.0
  %1005 = vmatpush.msra.mxu0 0.0
  %1006 = vmatpush.msra.mxu0 %v985
  %1007 = vmatpush.msra.mxu0 %v984
  %1008 = vmatmul.f32.gmra.mxu0 %v987
  %v1009 = vpop.f32.mrf.mxu0
  %v1010 = vadd.f32 0.0, %v1009
  %1011 = vmatmul.f32.gmra.mxu0 %v990
  %v1012 = vpop.f32.mrf.mxu0
  %v1013 = vadd.f32 0.0, %v1012
  %1014 = vdwg.mxu0
  %v1015 = vld [vmem:[%s8] sm:$0xff]
  %v1016 = vld [vmem:[%s8 + $0x8] sm:$0xff]
  %1017 = vmatpush.msra.mxu0 0.0
  %1018 = vmatpush.msra.mxu0 0.0
  %1019 = vmatpush.msra.mxu0 0.0
  %1020 = vmatpush.msra.mxu0 0.0
  %1021 = vmatpush.msra.mxu0 0.0
  %1022 = vmatpush.msra.mxu0 0.0
  %1023 = vmatpush.msra.mxu0 0.0
  %1024 = vmatpush.msra.mxu0 0.0
  %1025 = vmatpush.msra.mxu0 0.0
  %1026 = vmatpush.msra.mxu0 0.0
  %1027 = vmatpush.msra.mxu0 0.0
  %1028 = vmatpush.msra.mxu0 0.0
  %1029 = vmatpush.msra.mxu0 0.0
  %1030 = vmatpush.msra.mxu0 0.0
  %1031 = vmatpush.msra.mxu0 %v1016
  %1032 = vmatpush.msra.mxu0 %v1015
  %1033 = vmatmul.f32.gmra.mxu0 %v987
  %v1034 = vpop.f32.mrf.mxu0
  %v1035 = vadd.f32 0.0, %v1034
  %1036 = vmatmul.f32.gmra.mxu0 %v990
  %v1037 = vpop.f32.mrf.mxu0
  %v1038 = vadd.f32 0.0, %v1037
  %1039 = vdwg.mxu0
  %1040 = vxpose.xlu0.b32.start [1/16] %v1035, 128
  %1041 = vxpose.xlu0.b32.cont [2/16] %v1038, 128
  %1042 = vxpose.xlu0.b32.cont [3/16] 0.0, 128
  %1043 = vxpose.xlu0.b32.cont [4/16] 0.0, 128
  %1044 = vxpose.xlu0.b32.cont [5/16] 0.0, 128
  %1045 = vxpose.xlu0.b32.cont [6/16] 0.0, 128
  %1046 = vxpose.xlu0.b32.cont [7/16] 0.0, 128
  %1047 = vxpose.xlu0.b32.cont [8/16] 0.0, 128
  %1048 = vxpose.xlu0.b32.cont [9/16] 0.0, 128
  %1049 = vxpose.xlu0.b32.cont [10/16] 0.0, 128
  %1050 = vxpose.xlu0.b32.cont [11/16] 0.0, 128
  %1051 = vxpose.xlu0.b32.cont [12/16] 0.0, 128
  %1052 = vxpose.xlu0.b32.cont [13/16] 0.0, 128
  %1053 = vxpose.xlu0.b32.cont [14/16] 0.0, 128
  %1054 = vxpose.xlu0.b32.cont [15/16] 0.0, 128
  %1055 = vxpose.xlu0.b32.end [16/16] 0.0, 128
  %v1056 = vpop.trf.xlu0
  %v1057 = vpop.trf.xlu0
  %v1058 = vpop.trf.xlu0
  %v1059 = vpop.trf.xlu0
  %v1060 = vpop.trf.xlu0
  %v1061 = vpop.trf.xlu0
  %v1062 = vpop.trf.xlu0
  %v1063 = vpop.trf.xlu0
  %v1064 = vpop.trf.xlu0
  %v1065 = vpop.trf.xlu0
  %v1066 = vpop.trf.xlu0
  %v1067 = vpop.trf.xlu0
  %v1068 = vpop.trf.xlu0
  %v1069 = vpop.trf.xlu0
  %v1070 = vpop.trf.xlu0
  %v1071 = vpop.trf.xlu0
  %v1072 = vld [vmem:[%s10] sm:$0x1]
  %1074 = vset.pattern.permute.xlu0 0
  %1075 = vperm.xlu0 %1074, %v1010
  %v1076 = vpop.permute.xlu0 %1075
  %1079 = vset.pattern.permute.xlu0 0
  %1080 = vperm.xlu0 %1079, %v1013
  %v1081 = vpop.permute.xlu0 %1080
  %v1083 = vperm.slane %v1056, 0
  %v1084 = vadd.f32 %v1076, %v1083
  %v1085 = vadd.f32 %v1081, %v1083
  %vm1086 = vcmp.gt.f32.partialorder %v1084, 0.0
  %vm1087 = vcmp.gt.f32.partialorder %v1085, 0.0
  %v1088 = vmul.f32 %v1084, 0.2
  %v1089 = vmul.f32 %v1085, 0.2
  %v1090 = vsel %vm1086, %v1084, %v1088
  %v1091 = vsel %vm1087, %v1085, %v1089
  %v1092 = vsel %vm89, %v1090, -1e+30
  %v1093 = vsel %vm90, %v1091, -1e+30
  %v1094 = vsel %vm245, %v1092, -inf
  %1095 = vmax.xlane.f32.xlu0 %v1094
  %v1096 = vpop.xlane.xlu0 %1095
  %v1097 = vsel %vm245, %v1093, -inf
  %1098 = vmax.xlane.f32.xlu0 %v1097
  %v1099 = vpop.xlane.xlu0 %1098
  %v1100 = vsub.f32 %v1092, %v1096
  %v1101 = vsub.f32 %v1093, %v1099
  %v1102 = vmul.f32 %v1100, 1.442695
  %v1103 = vpow.pop %v1102
  %v1104 = vmul.f32 %v1101, 1.442695
  %v1105 = vpow.pop %v1104
  %v1106 = vsel %vm89, %v1103, 0.0
  %v1107 = vsel %vm90, %v1105, 0.0
  %v1108 = vsel %vm245, %v1106, 0.0
  %1109 = vadd.xlane.f32.xlu0 %v1108
  %v1110 = vpop.xlane.xlu0 %1109
  %v1111 = vsel %vm245, %v1107, 0.0
  %1112 = vadd.xlane.f32.xlu0 %v1111
  %v1113 = vpop.xlane.xlu0 %1112
  %v1114 = vrcp.pop %v1110
  %v1115 = vrcp.pop %v1113
  %v1116 = vmul.f32 %v1106, %v1114
  %v1117 = vmul.f32 %v1107, %v1115
  %v1119 = vperm.slane %v1072, 0
  %v1122 = vsel %vm245, %v1116, 0
  %v1125 = vsel %vm245, %v1117, 0
  %1127 = vmatpush.msra.mxu0 0.0
  %1128 = vmatpush.msra.mxu0 0.0
  %1129 = vmatpush.msra.mxu0 0.0
  %1130 = vmatpush.msra.mxu0 0.0
  %1131 = vmatpush.msra.mxu0 0.0
  %1132 = vmatpush.msra.mxu0 0.0
  %1133 = vmatpush.msra.mxu0 0.0
  %1134 = vmatpush.msra.mxu0 0.0
  %1135 = vmatpush.msra.mxu0 0.0
  %1136 = vmatpush.msra.mxu0 0.0
  %1137 = vmatpush.msra.mxu0 0.0
  %1138 = vmatpush.msra.mxu0 0.0
  %1139 = vmatpush.msra.mxu0 0.0
  %1140 = vmatpush.msra.mxu0 0.0
  %1141 = vmatpush.msra.mxu0 %v982
  %1142 = vmatpush.msra.mxu0 %v979
  %1143 = vmatmul.f32.gmra.mxu0 %v1122
  %v1144 = vpop.f32.mrf.mxu0
  %v1145 = vadd.f32 %v1119, %v1144
  %1146 = vmatmul.f32.gmra.mxu0 %v1125
  %v1147 = vpop.f32.mrf.mxu0
  %v1148 = vadd.f32 %v1119, %v1147
  %1149 = vdwg.mxu0
  %1150 = vst.msk [vmem:[#allocation3] sm:$0xff] %vm302, %v1145
  %1151 = vst.msk [vmem:[#allocation3 + $0x8] sm:$0xff] %vm302, %v1148
  %1152 = vset.pattern.permute.xlu0 1
  %1153 = vperm.xlu0 %1152, %v1010
  %v1154 = vpop.permute.xlu0 %1153
  %1156 = vset.pattern.permute.xlu0 1
  %1157 = vperm.xlu0 %1156, %v1013
  %v1158 = vpop.permute.xlu0 %1157
  %v1160 = vperm.slane %v1056, 1
  %v1161 = vadd.f32 %v1154, %v1160
  %v1162 = vadd.f32 %v1158, %v1160
  %vm1163 = vcmp.gt.f32.partialorder %v1161, 0.0
  %vm1164 = vcmp.gt.f32.partialorder %v1162, 0.0
  %v1165 = vmul.f32 %v1161, 0.2
  %v1166 = vmul.f32 %v1162, 0.2
  %v1167 = vsel %vm1163, %v1161, %v1165
  %v1168 = vsel %vm1164, %v1162, %v1166
  %v1169 = vsel %vm89, %v1167, -1e+30
  %v1170 = vsel %vm90, %v1168, -1e+30
  %v1171 = vsel %vm245, %v1169, -inf
  %1172 = vmax.xlane.f32.xlu0 %v1171
  %v1173 = vpop.xlane.xlu0 %1172
  %v1174 = vsel %vm245, %v1170, -inf
  %1175 = vmax.xlane.f32.xlu0 %v1174
  %v1176 = vpop.xlane.xlu0 %1175
  %v1177 = vsub.f32 %v1169, %v1173
  %v1178 = vsub.f32 %v1170, %v1176
  %v1179 = vmul.f32 %v1177, 1.442695
  %v1180 = vpow.pop %v1179
  %v1181 = vmul.f32 %v1178, 1.442695
  %v1182 = vpow.pop %v1181
  %v1183 = vsel %vm89, %v1180, 0.0
  %v1184 = vsel %vm90, %v1182, 0.0
  %v1185 = vsel %vm245, %v1183, 0.0
  %1186 = vadd.xlane.f32.xlu0 %v1185
  %v1187 = vpop.xlane.xlu0 %1186
  %v1188 = vsel %vm245, %v1184, 0.0
  %1189 = vadd.xlane.f32.xlu0 %v1188
  %v1190 = vpop.xlane.xlu0 %1189
  %v1191 = vrcp.pop %v1187
  %v1192 = vrcp.pop %v1190
  %v1193 = vmul.f32 %v1183, %v1191
  %v1194 = vmul.f32 %v1184, %v1192
  %1195 = vrot.lane.b32.xlu0 %v979, 124
  %v1196 = vpop.permute.xlu0 %1195
  %1197 = vrot.lane.b32.xlu0 %v982, 124
  %v1198 = vpop.permute.xlu0 %1197
  %1201 = vrot.lane.b32.xlu0 %v1119, 124
  %v1202 = vpop.permute.xlu0 %1201
  %v1205 = vsel %vm245, %v1193, 0
  %v1208 = vsel %vm245, %v1194, 0
  %1210 = vmatpush.msra.mxu0 0.0
  %1211 = vmatpush.msra.mxu0 0.0
  %1212 = vmatpush.msra.mxu0 0.0
  %1213 = vmatpush.msra.mxu0 0.0
  %1214 = vmatpush.msra.mxu0 0.0
  %1215 = vmatpush.msra.mxu0 0.0
  %1216 = vmatpush.msra.mxu0 0.0
  %1217 = vmatpush.msra.mxu0 0.0
  %1218 = vmatpush.msra.mxu0 0.0
  %1219 = vmatpush.msra.mxu0 0.0
  %1220 = vmatpush.msra.mxu0 0.0
  %1221 = vmatpush.msra.mxu0 0.0
  %1222 = vmatpush.msra.mxu0 0.0
  %1223 = vmatpush.msra.mxu0 0.0
  %1224 = vmatpush.msra.mxu0 %v1198
  %1225 = vmatpush.msra.mxu0 %v1196
  %1226 = vmatmul.f32.gmra.mxu0 %v1205
  %v1227 = vpop.f32.mrf.mxu0
  %v1228 = vadd.f32 %v1202, %v1227
  %1229 = vmatmul.f32.gmra.mxu0 %v1208
  %v1230 = vpop.f32.mrf.mxu0
  %v1231 = vadd.f32 %v1202, %v1230
  %1232 = vdwg.mxu0
  %1235 = vrot.lane.b32.xlu0 %v1228, 4
  %v1236 = vpop.permute.xlu0 %1235
  %1237 = vrot.lane.b32.xlu0 %v1231, 4
  %v1238 = vpop.permute.xlu0 %1237
  %1241 = vst.msk [vmem:[#allocation3] sm:$0xff] %vm394, %v1236
  %1242 = vst.msk [vmem:[#allocation3 + $0x8] sm:$0xff] %vm394, %v1238
  %1243 = vset.pattern.permute.xlu0 2
  %1244 = vperm.xlu0 %1243, %v1010
  %v1245 = vpop.permute.xlu0 %1244
  %1247 = vset.pattern.permute.xlu0 2
  %1248 = vperm.xlu0 %1247, %v1013
  %v1249 = vpop.permute.xlu0 %1248
  %v1251 = vperm.slane %v1056, 2
  %v1252 = vadd.f32 %v1245, %v1251
  %v1253 = vadd.f32 %v1249, %v1251
  %vm1254 = vcmp.gt.f32.partialorder %v1252, 0.0
  %vm1255 = vcmp.gt.f32.partialorder %v1253, 0.0
  %v1256 = vmul.f32 %v1252, 0.2
  %v1257 = vmul.f32 %v1253, 0.2
  %v1258 = vsel %vm1254, %v1252, %v1256
  %v1259 = vsel %vm1255, %v1253, %v1257
  %v1260 = vsel %vm89, %v1258, -1e+30
  %v1261 = vsel %vm90, %v1259, -1e+30
  %v1262 = vsel %vm245, %v1260, -inf
  %1263 = vmax.xlane.f32.xlu0 %v1262
  %v1264 = vpop.xlane.xlu0 %1263
  %v1265 = vsel %vm245, %v1261, -inf
  %1266 = vmax.xlane.f32.xlu0 %v1265
  %v1267 = vpop.xlane.xlu0 %1266
  %v1268 = vsub.f32 %v1260, %v1264
  %v1269 = vsub.f32 %v1261, %v1267
  %v1270 = vmul.f32 %v1268, 1.442695
  %v1271 = vpow.pop %v1270
  %v1272 = vmul.f32 %v1269, 1.442695
  %v1273 = vpow.pop %v1272
  %v1274 = vsel %vm89, %v1271, 0.0
  %v1275 = vsel %vm90, %v1273, 0.0
  %v1276 = vsel %vm245, %v1274, 0.0
  %1277 = vadd.xlane.f32.xlu0 %v1276
  %v1278 = vpop.xlane.xlu0 %1277
  %v1279 = vsel %vm245, %v1275, 0.0
  %1280 = vadd.xlane.f32.xlu0 %v1279
  %v1281 = vpop.xlane.xlu0 %1280
  %v1282 = vrcp.pop %v1278
  %v1283 = vrcp.pop %v1281
  %v1284 = vmul.f32 %v1274, %v1282
  %v1285 = vmul.f32 %v1275, %v1283
  %1286 = vrot.lane.b32.xlu0 %v979, 120
  %v1287 = vpop.permute.xlu0 %1286
  %1288 = vrot.lane.b32.xlu0 %v982, 120
  %v1289 = vpop.permute.xlu0 %1288
  %1292 = vrot.lane.b32.xlu0 %v1119, 120
  %v1293 = vpop.permute.xlu0 %1292
  %v1296 = vsel %vm245, %v1284, 0
  %v1299 = vsel %vm245, %v1285, 0
  %1301 = vmatpush.msra.mxu0 0.0
  %1302 = vmatpush.msra.mxu0 0.0
  %1303 = vmatpush.msra.mxu0 0.0
  %1304 = vmatpush.msra.mxu0 0.0
  %1305 = vmatpush.msra.mxu0 0.0
  %1306 = vmatpush.msra.mxu0 0.0
  %1307 = vmatpush.msra.mxu0 0.0
  %1308 = vmatpush.msra.mxu0 0.0
  %1309 = vmatpush.msra.mxu0 0.0
  %1310 = vmatpush.msra.mxu0 0.0
  %1311 = vmatpush.msra.mxu0 0.0
  %1312 = vmatpush.msra.mxu0 0.0
  %1313 = vmatpush.msra.mxu0 0.0
  %1314 = vmatpush.msra.mxu0 0.0
  %1315 = vmatpush.msra.mxu0 %v1289
  %1316 = vmatpush.msra.mxu0 %v1287
  %1317 = vmatmul.f32.gmra.mxu0 %v1296
  %v1318 = vpop.f32.mrf.mxu0
  %v1319 = vadd.f32 %v1293, %v1318
  %1320 = vmatmul.f32.gmra.mxu0 %v1299
  %v1321 = vpop.f32.mrf.mxu0
  %v1322 = vadd.f32 %v1293, %v1321
  %1323 = vdwg.mxu0
  %1326 = vrot.lane.b32.xlu0 %v1319, 8
  %v1327 = vpop.permute.xlu0 %1326
  %1328 = vrot.lane.b32.xlu0 %v1322, 8
  %v1329 = vpop.permute.xlu0 %1328
  %1332 = vst.msk [vmem:[#allocation3] sm:$0xff] %vm486, %v1327
  %1333 = vst.msk [vmem:[#allocation3 + $0x8] sm:$0xff] %vm486, %v1329
  %1334 = vset.pattern.permute.xlu0 3
  %1335 = vperm.xlu0 %1334, %v1010
  %v1336 = vpop.permute.xlu0 %1335
  %1338 = vset.pattern.permute.xlu0 3
  %1339 = vperm.xlu0 %1338, %v1013
  %v1340 = vpop.permute.xlu0 %1339
  %v1342 = vperm.slane %v1056, 3
  %v1343 = vadd.f32 %v1336, %v1342
  %v1344 = vadd.f32 %v1340, %v1342
  %vm1345 = vcmp.gt.f32.partialorder %v1343, 0.0
  %vm1346 = vcmp.gt.f32.partialorder %v1344, 0.0
  %v1347 = vmul.f32 %v1343, 0.2
  %v1348 = vmul.f32 %v1344, 0.2
  %v1349 = vsel %vm1345, %v1343, %v1347
  %v1350 = vsel %vm1346, %v1344, %v1348
  %v1351 = vsel %vm89, %v1349, -1e+30
  %v1352 = vsel %vm90, %v1350, -1e+30
  %v1353 = vsel %vm245, %v1351, -inf
  %1354 = vmax.xlane.f32.xlu0 %v1353
  %v1355 = vpop.xlane.xlu0 %1354
  %v1356 = vsel %vm245, %v1352, -inf
  %1357 = vmax.xlane.f32.xlu0 %v1356
  %v1358 = vpop.xlane.xlu0 %1357
  %v1359 = vsub.f32 %v1351, %v1355
  %v1360 = vsub.f32 %v1352, %v1358
  %v1361 = vmul.f32 %v1359, 1.442695
  %v1362 = vpow.pop %v1361
  %v1363 = vmul.f32 %v1360, 1.442695
  %v1364 = vpow.pop %v1363
  %v1365 = vsel %vm89, %v1362, 0.0
  %v1366 = vsel %vm90, %v1364, 0.0
  %v1367 = vsel %vm245, %v1365, 0.0
  %1368 = vadd.xlane.f32.xlu0 %v1367
  %v1369 = vpop.xlane.xlu0 %1368
  %v1370 = vsel %vm245, %v1366, 0.0
  %1371 = vadd.xlane.f32.xlu0 %v1370
  %v1372 = vpop.xlane.xlu0 %1371
  %v1373 = vrcp.pop %v1369
  %v1374 = vrcp.pop %v1372
  %v1375 = vmul.f32 %v1365, %v1373
  %v1376 = vmul.f32 %v1366, %v1374
  %1377 = vrot.lane.b32.xlu0 %v979, 116
  %v1378 = vpop.permute.xlu0 %1377
  %1379 = vrot.lane.b32.xlu0 %v982, 116
  %v1380 = vpop.permute.xlu0 %1379
  %1383 = vrot.lane.b32.xlu0 %v1119, 116
  %v1384 = vpop.permute.xlu0 %1383
  %v1387 = vsel %vm245, %v1375, 0
  %v1390 = vsel %vm245, %v1376, 0
  %1392 = vmatpush.msra.mxu0 0.0
  %1393 = vmatpush.msra.mxu0 0.0
  %1394 = vmatpush.msra.mxu0 0.0
  %1395 = vmatpush.msra.mxu0 0.0
  %1396 = vmatpush.msra.mxu0 0.0
  %1397 = vmatpush.msra.mxu0 0.0
  %1398 = vmatpush.msra.mxu0 0.0
  %1399 = vmatpush.msra.mxu0 0.0
  %1400 = vmatpush.msra.mxu0 0.0
  %1401 = vmatpush.msra.mxu0 0.0
  %1402 = vmatpush.msra.mxu0 0.0
  %1403 = vmatpush.msra.mxu0 0.0
  %1404 = vmatpush.msra.mxu0 0.0
  %1405 = vmatpush.msra.mxu0 0.0
  %1406 = vmatpush.msra.mxu0 %v1380
  %1407 = vmatpush.msra.mxu0 %v1378
  %1408 = vmatmul.f32.gmra.mxu0 %v1387
  %v1409 = vpop.f32.mrf.mxu0
  %v1410 = vadd.f32 %v1384, %v1409
  %1411 = vmatmul.f32.gmra.mxu0 %v1390
  %v1412 = vpop.f32.mrf.mxu0
  %v1413 = vadd.f32 %v1384, %v1412
  %1414 = vdwg.mxu0
  %1417 = vrot.lane.b32.xlu0 %v1410, 12
  %v1418 = vpop.permute.xlu0 %1417
  %1419 = vrot.lane.b32.xlu0 %v1413, 12
  %v1420 = vpop.permute.xlu0 %1419
  %1423 = vst.msk [vmem:[#allocation3] sm:$0xff] %vm578, %v1418
  %1424 = vst.msk [vmem:[#allocation3 + $0x8] sm:$0xff] %vm578, %v1420
  %v1425 = vld [vmem:[#allocation3] sm:$0xff]
  %v1426 = vld [vmem:[#allocation3 + $0x8] sm:$0xff]
  %v1427 = vld [vmem:[%s11] sm:$0xff]
  %v1428 = vld [vmem:[%s11 + $0x8] sm:$0xff]
  %v1430 = vsel %vm245, %v1425, 0
  %v1433 = vsel %vm245, %v1426, 0
  %1435 = vmatpush.msra.mxu0 0.0
  %1436 = vmatpush.msra.mxu0 0.0
  %1437 = vmatpush.msra.mxu0 0.0
  %1438 = vmatpush.msra.mxu0 0.0
  %1439 = vmatpush.msra.mxu0 0.0
  %1440 = vmatpush.msra.mxu0 0.0
  %1441 = vmatpush.msra.mxu0 0.0
  %1442 = vmatpush.msra.mxu0 0.0
  %1443 = vmatpush.msra.mxu0 0.0
  %1444 = vmatpush.msra.mxu0 0.0
  %1445 = vmatpush.msra.mxu0 0.0
  %1446 = vmatpush.msra.mxu0 0.0
  %1447 = vmatpush.msra.mxu0 0.0
  %1448 = vmatpush.msra.mxu0 0.0
  %1449 = vmatpush.msra.mxu0 %v1428
  %1450 = vmatpush.msra.mxu0 %v1427
  %1451 = vmatmul.f32.gmra.mxu0 %v1430
  %v1452 = vpop.f32.mrf.mxu0
  %v1453 = vadd.f32 0.0, %v1452
  %1454 = vmatmul.f32.gmra.mxu0 %v1433
  %v1455 = vpop.f32.mrf.mxu0
  %v1456 = vadd.f32 0.0, %v1455
  %1457 = vdwg.mxu0
  %v1458 = vld [vmem:[%s13] sm:$0xff]
  %vm1459 = vcmask 64512
  %v1461 = vsel %vm1459, %v1453, 0
  %v1464 = vsel %vm1459, %v1456, 0
  %1466 = vmatpush.msra.mxu0 0.0
  %1467 = vmatpush.msra.mxu0 0.0
  %1468 = vmatpush.msra.mxu0 0.0
  %1469 = vmatpush.msra.mxu0 0.0
  %1470 = vmatpush.msra.mxu0 0.0
  %1471 = vmatpush.msra.mxu0 0.0
  %1472 = vmatpush.msra.mxu0 0.0
  %1473 = vmatpush.msra.mxu0 0.0
  %1474 = vmatpush.msra.mxu0 0.0
  %1475 = vmatpush.msra.mxu0 0.0
  %1476 = vmatpush.msra.mxu0 0.0
  %1477 = vmatpush.msra.mxu0 0.0
  %1478 = vmatpush.msra.mxu0 0.0
  %1479 = vmatpush.msra.mxu0 0.0
  %1480 = vmatpush.msra.mxu0 0.0
  %1481 = vmatpush.msra.mxu0 %v1458
  %1482 = vmatmul.f32.gmra.mxu0 %v1461
  %v1483 = vpop.f32.mrf.mxu0
  %v1484 = vadd.f32 0.0, %v1483
  %1485 = vmatmul.f32.gmra.mxu0 %v1464
  %v1486 = vpop.f32.mrf.mxu0
  %v1487 = vadd.f32 0.0, %v1486
  %1488 = vdwg.mxu0
  %v1489 = vld [vmem:[%s12] sm:$0xff]
  %1490 = vmatpush.msra.mxu0 0.0
  %1491 = vmatpush.msra.mxu0 0.0
  %1492 = vmatpush.msra.mxu0 0.0
  %1493 = vmatpush.msra.mxu0 0.0
  %1494 = vmatpush.msra.mxu0 0.0
  %1495 = vmatpush.msra.mxu0 0.0
  %1496 = vmatpush.msra.mxu0 0.0
  %1497 = vmatpush.msra.mxu0 0.0
  %1498 = vmatpush.msra.mxu0 0.0
  %1499 = vmatpush.msra.mxu0 0.0
  %1500 = vmatpush.msra.mxu0 0.0
  %1501 = vmatpush.msra.mxu0 0.0
  %1502 = vmatpush.msra.mxu0 0.0
  %1503 = vmatpush.msra.mxu0 0.0
  %1504 = vmatpush.msra.mxu0 0.0
  %1505 = vmatpush.msra.mxu0 %v1489
  %1506 = vmatmul.f32.gmra.mxu0 %v1461
  %v1507 = vpop.f32.mrf.mxu0
  %v1508 = vadd.f32 0.0, %v1507
  %1509 = vmatmul.f32.gmra.mxu0 %v1464
  %v1510 = vpop.f32.mrf.mxu0
  %v1511 = vadd.f32 0.0, %v1510
  %1512 = vdwg.mxu0
  %1513 = vxpose.xlu0.b32.start [1/16] %v1508, 128
  %1514 = vxpose.xlu0.b32.cont [2/16] %v1511, 128
  %1515 = vxpose.xlu0.b32.cont [3/16] 0.0, 128
  %1516 = vxpose.xlu0.b32.cont [4/16] 0.0, 128
  %1517 = vxpose.xlu0.b32.cont [5/16] 0.0, 128
  %1518 = vxpose.xlu0.b32.cont [6/16] 0.0, 128
  %1519 = vxpose.xlu0.b32.cont [7/16] 0.0, 128
  %1520 = vxpose.xlu0.b32.cont [8/16] 0.0, 128
  %1521 = vxpose.xlu0.b32.cont [9/16] 0.0, 128
  %1522 = vxpose.xlu0.b32.cont [10/16] 0.0, 128
  %1523 = vxpose.xlu0.b32.cont [11/16] 0.0, 128
  %1524 = vxpose.xlu0.b32.cont [12/16] 0.0, 128
  %1525 = vxpose.xlu0.b32.cont [13/16] 0.0, 128
  %1526 = vxpose.xlu0.b32.cont [14/16] 0.0, 128
  %1527 = vxpose.xlu0.b32.cont [15/16] 0.0, 128
  %1528 = vxpose.xlu0.b32.end [16/16] 0.0, 128
  %v1529 = vpop.trf.xlu0
  %v1530 = vpop.trf.xlu0
  %v1531 = vpop.trf.xlu0
  %v1532 = vpop.trf.xlu0
  %v1533 = vpop.trf.xlu0
  %v1534 = vpop.trf.xlu0
  %v1535 = vpop.trf.xlu0
  %v1536 = vpop.trf.xlu0
  %v1537 = vpop.trf.xlu0
  %v1538 = vpop.trf.xlu0
  %v1539 = vpop.trf.xlu0
  %v1540 = vpop.trf.xlu0
  %v1541 = vpop.trf.xlu0
  %v1542 = vpop.trf.xlu0
  %v1543 = vpop.trf.xlu0
  %v1544 = vpop.trf.xlu0
  %v1545 = vld [vmem:[%s14] sm:$0x1]
  %1547 = vset.pattern.permute.xlu0 0
  %1548 = vperm.xlu0 %1547, %v1484
  %v1549 = vpop.permute.xlu0 %1548
  %1552 = vset.pattern.permute.xlu0 0
  %1553 = vperm.xlu0 %1552, %v1487
  %v1554 = vpop.permute.xlu0 %1553
  %v1556 = vperm.slane %v1529, 0
  %v1557 = vadd.f32 %v1549, %v1556
  %v1558 = vadd.f32 %v1554, %v1556
  %vm1559 = vcmp.gt.f32.partialorder %v1557, 0.0
  %vm1560 = vcmp.gt.f32.partialorder %v1558, 0.0
  %v1561 = vmul.f32 %v1557, 0.2
  %v1562 = vmul.f32 %v1558, 0.2
  %v1563 = vsel %vm1559, %v1557, %v1561
  %v1564 = vsel %vm1560, %v1558, %v1562
  %v1565 = vsel %vm89, %v1563, -1e+30
  %v1566 = vsel %vm90, %v1564, -1e+30
  %v1567 = vsel %vm245, %v1565, -inf
  %1568 = vmax.xlane.f32.xlu0 %v1567
  %v1569 = vpop.xlane.xlu0 %1568
  %v1570 = vsel %vm245, %v1566, -inf
  %1571 = vmax.xlane.f32.xlu0 %v1570
  %v1572 = vpop.xlane.xlu0 %1571
  %v1573 = vsub.f32 %v1565, %v1569
  %v1574 = vsub.f32 %v1566, %v1572
  %v1575 = vmul.f32 %v1573, 1.442695
  %v1576 = vpow.pop %v1575
  %v1577 = vmul.f32 %v1574, 1.442695
  %v1578 = vpow.pop %v1577
  %v1579 = vsel %vm89, %v1576, 0.0
  %v1580 = vsel %vm90, %v1578, 0.0
  %v1581 = vsel %vm245, %v1579, 0.0
  %1582 = vadd.xlane.f32.xlu0 %v1581
  %v1583 = vpop.xlane.xlu0 %1582
  %v1584 = vsel %vm245, %v1580, 0.0
  %1585 = vadd.xlane.f32.xlu0 %v1584
  %v1586 = vpop.xlane.xlu0 %1585
  %v1587 = vrcp.pop %v1583
  %v1588 = vrcp.pop %v1586
  %v1589 = vmul.f32 %v1579, %v1587
  %v1590 = vmul.f32 %v1580, %v1588
  %v1592 = vperm.slane %v1545, 0
  %v1595 = vsel %vm245, %v1589, 0
  %v1598 = vsel %vm245, %v1590, 0
  %1600 = vmatpush.msra.mxu0 0.0
  %1601 = vmatpush.msra.mxu0 0.0
  %1602 = vmatpush.msra.mxu0 0.0
  %1603 = vmatpush.msra.mxu0 0.0
  %1604 = vmatpush.msra.mxu0 0.0
  %1605 = vmatpush.msra.mxu0 0.0
  %1606 = vmatpush.msra.mxu0 0.0
  %1607 = vmatpush.msra.mxu0 0.0
  %1608 = vmatpush.msra.mxu0 0.0
  %1609 = vmatpush.msra.mxu0 0.0
  %1610 = vmatpush.msra.mxu0 0.0
  %1611 = vmatpush.msra.mxu0 0.0
  %1612 = vmatpush.msra.mxu0 0.0
  %1613 = vmatpush.msra.mxu0 0.0
  %1614 = vmatpush.msra.mxu0 %v1456
  %1615 = vmatpush.msra.mxu0 %v1453
  %1616 = vmatmul.f32.gmra.mxu0 %v1595
  %v1617 = vpop.f32.mrf.mxu0
  %v1618 = vadd.f32 %v1592, %v1617
  %1619 = vmatmul.f32.gmra.mxu0 %v1598
  %v1620 = vpop.f32.mrf.mxu0
  %v1621 = vadd.f32 %v1592, %v1620
  %1622 = vdwg.mxu0
  %1623 = vst.msk [vmem:[#allocation4] sm:$0xff] %vm302, %v1618
  %1624 = vst.msk [vmem:[#allocation4 + $0x8] sm:$0xff] %vm302, %v1621
  %1625 = vset.pattern.permute.xlu0 1
  %1626 = vperm.xlu0 %1625, %v1484
  %v1627 = vpop.permute.xlu0 %1626
  %1629 = vset.pattern.permute.xlu0 1
  %1630 = vperm.xlu0 %1629, %v1487
  %v1631 = vpop.permute.xlu0 %1630
  %v1633 = vperm.slane %v1529, 1
  %v1634 = vadd.f32 %v1627, %v1633
  %v1635 = vadd.f32 %v1631, %v1633
  %vm1636 = vcmp.gt.f32.partialorder %v1634, 0.0
  %vm1637 = vcmp.gt.f32.partialorder %v1635, 0.0
  %v1638 = vmul.f32 %v1634, 0.2
  %v1639 = vmul.f32 %v1635, 0.2
  %v1640 = vsel %vm1636, %v1634, %v1638
  %v1641 = vsel %vm1637, %v1635, %v1639
  %v1642 = vsel %vm89, %v1640, -1e+30
  %v1643 = vsel %vm90, %v1641, -1e+30
  %v1644 = vsel %vm245, %v1642, -inf
  %1645 = vmax.xlane.f32.xlu0 %v1644
  %v1646 = vpop.xlane.xlu0 %1645
  %v1647 = vsel %vm245, %v1643, -inf
  %1648 = vmax.xlane.f32.xlu0 %v1647
  %v1649 = vpop.xlane.xlu0 %1648
  %v1650 = vsub.f32 %v1642, %v1646
  %v1651 = vsub.f32 %v1643, %v1649
  %v1652 = vmul.f32 %v1650, 1.442695
  %v1653 = vpow.pop %v1652
  %v1654 = vmul.f32 %v1651, 1.442695
  %v1655 = vpow.pop %v1654
  %v1656 = vsel %vm89, %v1653, 0.0
  %v1657 = vsel %vm90, %v1655, 0.0
  %v1658 = vsel %vm245, %v1656, 0.0
  %1659 = vadd.xlane.f32.xlu0 %v1658
  %v1660 = vpop.xlane.xlu0 %1659
  %v1661 = vsel %vm245, %v1657, 0.0
  %1662 = vadd.xlane.f32.xlu0 %v1661
  %v1663 = vpop.xlane.xlu0 %1662
  %v1664 = vrcp.pop %v1660
  %v1665 = vrcp.pop %v1663
  %v1666 = vmul.f32 %v1656, %v1664
  %v1667 = vmul.f32 %v1657, %v1665
  %1668 = vrot.lane.b32.xlu0 %v1453, 124
  %v1669 = vpop.permute.xlu0 %1668
  %1670 = vrot.lane.b32.xlu0 %v1456, 124
  %v1671 = vpop.permute.xlu0 %1670
  %1674 = vrot.lane.b32.xlu0 %v1592, 124
  %v1675 = vpop.permute.xlu0 %1674
  %v1678 = vsel %vm245, %v1666, 0
  %v1681 = vsel %vm245, %v1667, 0
  %1683 = vmatpush.msra.mxu0 0.0
  %1684 = vmatpush.msra.mxu0 0.0
  %1685 = vmatpush.msra.mxu0 0.0
  %1686 = vmatpush.msra.mxu0 0.0
  %1687 = vmatpush.msra.mxu0 0.0
  %1688 = vmatpush.msra.mxu0 0.0
  %1689 = vmatpush.msra.mxu0 0.0
  %1690 = vmatpush.msra.mxu0 0.0
  %1691 = vmatpush.msra.mxu0 0.0
  %1692 = vmatpush.msra.mxu0 0.0
  %1693 = vmatpush.msra.mxu0 0.0
  %1694 = vmatpush.msra.mxu0 0.0
  %1695 = vmatpush.msra.mxu0 0.0
  %1696 = vmatpush.msra.mxu0 0.0
  %1697 = vmatpush.msra.mxu0 %v1671
  %1698 = vmatpush.msra.mxu0 %v1669
  %1699 = vmatmul.f32.gmra.mxu0 %v1678
  %v1700 = vpop.f32.mrf.mxu0
  %v1701 = vadd.f32 %v1675, %v1700
  %1702 = vmatmul.f32.gmra.mxu0 %v1681
  %v1703 = vpop.f32.mrf.mxu0
  %v1704 = vadd.f32 %v1675, %v1703
  %1705 = vdwg.mxu0
  %1708 = vrot.lane.b32.xlu0 %v1701, 4
  %v1709 = vpop.permute.xlu0 %1708
  %1710 = vrot.lane.b32.xlu0 %v1704, 4
  %v1711 = vpop.permute.xlu0 %1710
  %1714 = vst.msk [vmem:[#allocation4] sm:$0xff] %vm394, %v1709
  %1715 = vst.msk [vmem:[#allocation4 + $0x8] sm:$0xff] %vm394, %v1711
  %v1716 = vld [vmem:[#allocation4] sm:$0xff]
  %v1717 = vld [vmem:[#allocation4 + $0x8] sm:$0xff]
  %v1718 = vsel %vm245, %v55, 0.0
  %1719 = vadd.xlane.f32.xlu0 %v1718
  %v1720 = vpop.xlane.xlu0 %1719
  %v1721 = vsel %vm245, %v56, 0.0
  %1722 = vadd.xlane.f32.xlu0 %v1721
  %v1723 = vpop.xlane.xlu0 %1722
  %v1724 = vrcp.pop %v1720
  %v1725 = vrcp.pop %v1723
  %v1726 = vmul.f32 %v55, %v1724
  %v1727 = vmul.f32 %v56, %v1725
  %v1729 = vsel %vm245, %v1726, 0
  %v1732 = vsel %vm245, %v1727, 0
  %1734 = vmatpush.msra.mxu0 0.0
  %1735 = vmatpush.msra.mxu0 0.0
  %1736 = vmatpush.msra.mxu0 0.0
  %1737 = vmatpush.msra.mxu0 0.0
  %1738 = vmatpush.msra.mxu0 0.0
  %1739 = vmatpush.msra.mxu0 0.0
  %1740 = vmatpush.msra.mxu0 0.0
  %1741 = vmatpush.msra.mxu0 0.0
  %1742 = vmatpush.msra.mxu0 0.0
  %1743 = vmatpush.msra.mxu0 0.0
  %1744 = vmatpush.msra.mxu0 0.0
  %1745 = vmatpush.msra.mxu0 0.0
  %1746 = vmatpush.msra.mxu0 0.0
  %1747 = vmatpush.msra.mxu0 0.0
  %1748 = vmatpush.msra.mxu0 %v1717
  %1749 = vmatpush.msra.mxu0 %v1716
  %1750 = vmatmul.f32.gmra.mxu0 %v1729
  %v1751 = vpop.f32.mrf.mxu0
  %v1752 = vadd.f32 0.0, %v1751
  %1753 = vmatmul.f32.gmra.mxu0 %v1732
  %v1754 = vpop.f32.mrf.mxu0
  %v1755 = vadd.f32 0.0, %v1754
  %1756 = vdwg.mxu0
  %v1757 = vmul.f32 %v1716, %v1752
  %v1758 = vmul.f32 %v1717, %v1755
  %v1759 = vsel %vm1459, %v1757, 0.0
  %1760 = vadd.xlane.f32.xlu0 %v1759
  %v1761 = vpop.xlane.xlu0 %1760
  %v1762 = vsel %vm1459, %v1758, 0.0
  %1763 = vadd.xlane.f32.xlu0 %v1762
  %v1764 = vpop.xlane.xlu0 %1763
  %v1765 = vadd.f32 %v1761, %v53
  %v1766 = vadd.f32 %v1764, %v54
  %v1767 = vld [vmem:[%s15] sm:$0xff]
  %v1769 = vsel %vm1459, %v1752, 0
  %v1772 = vsel %vm1459, %v1755, 0
  %1774 = vmatpush.msra.mxu0 0.0
  %1775 = vmatpush.msra.mxu0 0.0
  %1776 = vmatpush.msra.mxu0 0.0
  %1777 = vmatpush.msra.mxu0 0.0
  %1778 = vmatpush.msra.mxu0 0.0
  %1779 = vmatpush.msra.mxu0 0.0
  %1780 = vmatpush.msra.mxu0 0.0
  %1781 = vmatpush.msra.mxu0 0.0
  %1782 = vmatpush.msra.mxu0 0.0
  %1783 = vmatpush.msra.mxu0 0.0
  %1784 = vmatpush.msra.mxu0 0.0
  %1785 = vmatpush.msra.mxu0 0.0
  %1786 = vmatpush.msra.mxu0 0.0
  %1787 = vmatpush.msra.mxu0 0.0
  %1788 = vmatpush.msra.mxu0 0.0
  %1789 = vmatpush.msra.mxu0 %v1767
  %1790 = vmatmul.f32.gmra.mxu0 %v1769
  %v1791 = vpop.f32.mrf.mxu0
  %v1792 = vadd.f32 0.0, %v1791
  %1793 = vmatmul.f32.gmra.mxu0 %v1772
  %v1794 = vpop.f32.mrf.mxu0
  %v1795 = vadd.f32 0.0, %v1794
  %1796 = vdwg.mxu0
  %v1797 = vadd.f32 %v1765, %v1792
  %v1798 = vadd.f32 %v1766, %v1795
  %vm1799 = vcmask 7168
  %1800 = vst.msk [vmem:[%s16] sm:$0xff] %vm1799, %v1797
  %1801 = vst.msk [vmem:[%s16 + $0x8] sm:$0xff] %vm1799, %v1798
  // Predicated region
  $region66: #{nirm_forward.1} parent=0 // pred_check
    _
  $region67: #{nirm_forward.1} parent=0 // pred_check_branch
    %1803 = sbr.rel (0) target = $region69
  $region68: #{nirm_forward.1} parent=0 // pred_region
    _
  $region69: #{nirm_forward.1} parent=0 // pred_fallthru
    _
  // Predicated region
  $region70: #{nirm_forward.1} parent=0 // pred_check
    _
  $region71: #{nirm_forward.1} parent=0 // pred_check_branch
    %1805 = sbr.rel (0) target = $region73
  $region72: #{nirm_forward.1} parent=0 // pred_region
    _
  $region73: #{nirm_forward.1} parent=0 // pred_fallthru
    _

</llo_original>
